<compile_context>
chip_gen: v7x
topology: tpu7x:2x2x1
jax: 0.10.0
libtpu: 0.0.40
codegen_flags: <defaults>
</compile_context>

<pallas_src>
import math
import jax
import jax.numpy as jnp
from jax.experimental import pallas as pl
from jax.experimental.pallas import tpu as pltpu

NHEAD = 4  # number of attention heads (E must be divisible by NHEAD)


def _layernorm(x, gamma, beta, eps=1e-5):
    mu = jnp.mean(x, axis=-1, keepdims=True)
    var = jnp.mean((x - mu) ** 2, axis=-1, keepdims=True)
    return (x - mu) * jax.lax.rsqrt(var + eps) * gamma + beta


def _make_encoder_stack_kernel(need_weights):
    def kernel(x_ref, mask_ref,
               wqkv_ref, bqkv_ref, wo_ref, bo_ref,
               g1_ref, be1_ref, w1_ref, b1_ref, w2_ref, b2_ref,
               g2_ref, be2_ref,
               *out_and_scratch):
        if need_weights:
            y_ref, attn_ref, ctx_sc = out_and_scratch
        else:
            y_ref, ctx_sc = out_and_scratch
            attn_ref = None

        l = pl.program_id(1)
        BB, S, E = x_ref.shape
        H = NHEAD
        hd = E // H
        M = BB * S

        # Seed the resident activation (carried across the layer axis in the
        # y output block, whose index_map ignores l) on the first layer.
        @pl.when(l == 0)
        def _():
            y_ref[...] = x_ref[...]

        # Fold batch into the matmul M dimension.
        xm = y_ref[...].reshape(M, E)

        # Fused QKV projection: bf16 operands, f32 accumulate. The 1/sqrt(hd)
        # scale is already folded into Wq / bq on the host.
        qkv = jnp.dot(xm.astype(jnp.bfloat16), wqkv_ref[0],
                      preferred_element_type=jnp.float32) + bqkv_ref[0]
        qkv_bf = qkv.astype(jnp.bfloat16)   # single cast; sliced per head below

        mask = mask_ref[...]                # (BB,1,S) additive key-pad bias, f32

        attn_sum = jnp.zeros((BB, S, S), jnp.float32) if need_weights else None

        for h in range(H):                  # static unroll over heads
            qh = qkv_bf[:, h * hd:(h + 1) * hd].reshape(BB, S, hd)
            kh = qkv_bf[:, E + h * hd:E + (h + 1) * hd].reshape(BB, S, hd)
            vh = qkv_bf[:, 2 * E + h * hd:2 * E + (h + 1) * hd].reshape(BB, S, hd)

            # bf16 operands -> fast MXU path; accumulate scores in f32. The
            # (BB,1,S) mask broadcasts at the add (no materialized (BB,S,S)).
            # NOTE: a fully-masked query row yields ~uniform weights instead of
            # PyTorch's NaN.
            s = jnp.einsum('bqd,bkd->bqk', qh, kh,
                           preferred_element_type=jnp.float32) + mask
            s = s - jnp.max(s, axis=-1, keepdims=True)
            e = jnp.exp(s)
            # Exact reciprocal on the tiny (BB,S,1) denominator: these weights
            # are returned to the caller, so rows must sum to 1 exactly.
            p = e * (1.0 / jnp.sum(e, axis=-1, keepdims=True))
            if need_weights:
                attn_sum = attn_sum + p

            ctx = jnp.einsum('bqk,bkd->bqd', p.astype(jnp.bfloat16), vh,
                             preferred_element_type=jnp.float32)   # (BB,S,hd) f32
            # Write this head's context into its lane slice of the (M,E)
            # scratch so the output projection is ONE K=E matmul (accumulation
            # happens inside the MXU instead of H VPU adds over (M,E)).
            ctx_sc[:, h * hd:(h + 1) * hd] = ctx.reshape(M, hd)

        attn_out = jnp.dot(ctx_sc[...].astype(jnp.bfloat16), wo_ref[0],
                           preferred_element_type=jnp.float32) + bo_ref[0]
        h1 = _layernorm(xm + attn_out, g1_ref[0], be1_ref[0])

        # TODO(synk): at production shapes on v7x (64 MiB VMEM) tile this FFN
        # over M with an inner fori_loop so the (M,F) f32 intermediate never
        # exists whole.
        ff = jnp.maximum(
            jnp.dot(h1.astype(jnp.bfloat16), w1_ref[0],
                    preferred_element_type=jnp.float32) + b1_ref[0], 0.0)
        ff = jnp.dot(ff.astype(jnp.bfloat16), w2_ref[0],
                     preferred_element_type=jnp.float32) + b2_ref[0]
        h2 = _layernorm(h1 + ff, g2_ref[0], be2_ref[0])

        y_ref[...] = h2.reshape(BB, S, E)
        if need_weights:
            attn_ref[0] = attn_sum * (1.0 / H)   # heads-averaged weights
    return kernel


def transformer_encoder(x_sbe, key_padding_mask, layer_params,
                        batch_block=None, need_weights=True):
    """x_sbe: (S,B,E); key_padding_mask: (B,S) bool (True = pad).
    Returns (output (S,B,E), weights (L,B,S,S)) — same as the torch module."""
    S, B, E = x_sbe.shape
    L = len(layer_params)
    if L == 0:
        return x_sbe, None   # torch returns None for num_layers == 0

    H = NHEAD
    assert E % H == 0
    hd = E // H
    F = layer_params[0]["w1"].shape[1]
    scale = 1.0 / math.sqrt(hd)

    # Default batch block: NB >= 2 so both v7x TensorCores get programs on the
    # "parallel" batch grid axis (per-layer weight DMA is hidden under compute).
    if batch_block is None:
        BB = B // 2 if (B >= 2 and B % 2 == 0) else B
    else:
        BB = batch_block
    assert B % BB == 0
    NB = B // BB

    x = jnp.transpose(x_sbe, (1, 0, 2)).astype(jnp.float32)                     # (B,S,E)
    mask_add = jnp.where(key_padding_mask, -1e30, 0.0).astype(jnp.float32)[:, None, :]  # (B,1,S)

    # Stack per-layer weights on a leading L axis (whole stack = one pallas_call).
    # Matmul weights bf16; biases / LayerNorm params f32. 1/sqrt(hd) folded
    # into Wq / bq here (free).
    wqkv = jnp.stack([jnp.concatenate([p["wq"] * scale, p["wk"], p["wv"]], axis=1)
                      for p in layer_params]).astype(jnp.bfloat16)              # (L,E,3E)
    bqkv = jnp.stack([jnp.concatenate([p["bq"] * scale, p["bk"], p["bv"]], axis=1)
                      for p in layer_params])                                   # (L,1,3E)
    wo = jnp.stack([p["wo"] for p in layer_params]).astype(jnp.bfloat16)        # (L,E,E)
    bo = jnp.stack([p["bo"] for p in layer_params])
    g1 = jnp.stack([p["g1"] for p in layer_params])
    be1 = jnp.stack([p["be1"] for p in layer_params])
    w1 = jnp.stack([p["w1"] for p in layer_params]).astype(jnp.bfloat16)        # (L,E,F)
    b1 = jnp.stack([p["b1"] for p in layer_params])
    w2 = jnp.stack([p["w2"] for p in layer_params]).astype(jnp.bfloat16)        # (L,F,E)
    b2 = jnp.stack([p["b2"] for p in layer_params])
    g2 = jnp.stack([p["g2"] for p in layer_params])
    be2 = jnp.stack([p["be2"] for p in layer_params])

    def wspec(shape):
        nd = len(shape)
        return pl.BlockSpec((1,) + shape, lambda b, l, _n=nd: (l,) + (0,) * _n)

    in_specs = [
        pl.BlockSpec((BB, S, E), lambda b, l: (b, 0, 0)),   # x (seed; HBM aliased to y)
        pl.BlockSpec((BB, 1, S), lambda b, l: (b, 0, 0)),   # additive key-pad mask
        wspec((E, 3 * E)), wspec((1, 3 * E)),               # fused Wqkv, bqkv
        wspec((E, E)), wspec((1, E)),                       # Wo, bo
        wspec((1, E)), wspec((1, E)),                       # ln1 gamma, beta
        wspec((E, F)), wspec((1, F)),                       # ffn W1, b1
        wspec((F, E)), wspec((1, E)),                       # ffn W2, b2
        wspec((1, E)), wspec((1, E)),                       # ln2 gamma, beta
    ]
    out_specs = [pl.BlockSpec((BB, S, E), lambda b, l: (b, 0, 0))]
    out_shape = [jax.ShapeDtypeStruct((B, S, E), jnp.float32)]
    if need_weights:
        # TODO(synk): at realistic S, pad S to a multiple of 128 (lane-dense
        # stores) and/or emit bf16 to halve the HBM writeback traffic.
        out_specs.append(pl.BlockSpec((1, BB, S, S), lambda b, l: (l, b, 0, 0)))
        out_shape.append(jax.ShapeDtypeStruct((L, B, S, S), jnp.float32))

    # Per-generation VMEM budget: ~56 MiB on v7x (64 MiB physical), up to
    # ~112 MiB on v5e/v6e (128 MiB physical); safe fallback if query fails.
    try:
        cap = int(pltpu.get_tpu_info().vmem_capacity_bytes)
        vmem_limit = max(32 * 1024 * 1024, min(cap * 7 // 8, 112 * 1024 * 1024))
    except Exception:
        vmem_limit = 48 * 1024 * 1024

    outs = pl.pallas_call(
        _make_encoder_stack_kernel(need_weights),
        grid=(NB, L),
        in_specs=in_specs,
        out_specs=out_specs,
        out_shape=out_shape,
        scratch_shapes=[pltpu.VMEM((BB * S, E), jnp.float32)],   # per-head ctx assembly
        input_output_aliases={0: 0},    # reuse x's HBM buffer for the output
        compiler_params=pltpu.CompilerParams(
            dimension_semantics=("parallel", "arbitrary"),
            vmem_limit_bytes=vmem_limit),
    )(x, mask_add, wqkv, bqkv, wo, bo, g1, be1, w1, b1, w2, b2, g2, be2)

    y = outs[0]
    attn = outs[1] if need_weights else None
    return jnp.transpose(y, (1, 0, 2)), attn


def init_layer_params(key, E, F):
    ks = jax.random.split(key, 6)
    std = 0.02
    return {
        "wq": jax.random.normal(ks[0], (E, E), jnp.float32) * std,
        "bq": jnp.zeros((1, E), jnp.float32),
        "wk": jax.random.normal(ks[1], (E, E), jnp.float32) * std,
        "bk": jnp.zeros((1, E), jnp.float32),
        "wv": jax.random.normal(ks[2], (E, E), jnp.float32) * std,
        "bv": jnp.zeros((1, E), jnp.float32),
        "wo": jax.random.normal(ks[3], (E, E), jnp.float32) * std,
        "bo": jnp.zeros((1, E), jnp.float32),
        "g1": jnp.ones((1, E), jnp.float32),
        "be1": jnp.zeros((1, E), jnp.float32),
        "w1": jax.random.normal(ks[4], (E, F), jnp.float32) * std,
        "b1": jnp.zeros((1, F), jnp.float32),
        "w2": jax.random.normal(ks[5], (F, E), jnp.float32) * std,
        "b2": jnp.zeros((1, E), jnp.float32),
        "g2": jnp.ones((1, E), jnp.float32),
        "be2": jnp.zeros((1, E), jnp.float32),
    }


def _ref_encoder(x_sbe, key_padding_mask, layer_params):
    """Pure-JAX f32 reference (same math, un-fused) for correctness checking."""
    S, B, E = x_sbe.shape
    H = NHEAD
    hd = E // H
    scale = 1.0 / math.sqrt(hd)
    x = jnp.transpose(x_sbe, (1, 0, 2))
    bias = jnp.where(key_padding_mask, -1e30, 0.0)[:, None, None, :]   # (B,1,1,S)
    weights = []
    for p in layer_params:
        q = (x @ p["wq"] + p["bq"]) * scale
        k = x @ p["wk"] + p["bk"]
        v = x @ p["wv"] + p["bv"]
        qh = q.reshape(B, S, H, hd).transpose(0, 2, 1, 3)
        kh = k.reshape(B, S, H, hd).transpose(0, 2, 1, 3)
        vh = v.reshape(B, S, H, hd).transpose(0, 2, 1, 3)
        s = jnp.einsum('bhqd,bhkd->bhqk', qh, kh) + bias
        pw = jax.nn.softmax(s, axis=-1)
        weights.append(jnp.mean(pw, axis=1))
        ctx = jnp.einsum('bhqk,bhkd->bhqd', pw, vh).transpose(0, 2, 1, 3).reshape(B, S, E)
        attn_out = ctx @ p["wo"] + p["bo"]
        h1 = _layernorm(x + attn_out, p["g1"], p["be1"])
        ff = jnp.maximum(h1 @ p["w1"] + p["b1"], 0.0) @ p["w2"] + p["b2"]
        x = _layernorm(h1 + ff, p["g2"], p["be2"])
    return jnp.transpose(x, (1, 0, 2)), jnp.stack(weights)


if __name__ == "__main__":
    S, B, E, F = 8, 2, 32, 64
    NUM_LAYERS = 2

    key = jax.random.PRNGKey(0)
    kx, kp = jax.random.split(key)
    x = jax.random.normal(kx, (S, B, E), jnp.float32)            # seq-first (PyTorch layout)
    key_padding_mask = jnp.zeros((B, S), dtype=bool)
    key_padding_mask = key_padding_mask.at[1, -1].set(True)      # pad last token of batch 1

    layer_params = [init_layer_params(jax.random.fold_in(kp, i), E, F)
                    for i in range(NUM_LAYERS)]

    run = jax.jit(transformer_encoder)
    out, weights = run(x, key_padding_mask, layer_params)
    out = jax.block_until_ready(out)
    weights = jax.block_until_ready(weights)

    assert out.shape == (S, B, E)
    assert weights.shape == (NUM_LAYERS, B, S, S)
    assert bool(jnp.all(jnp.isfinite(out))) and bool(jnp.all(jnp.isfinite(weights)))
    # exact softmax normalization -> rows sum to 1
    assert bool(jnp.allclose(jnp.sum(weights, axis=-1), 1.0, atol=1e-3))

    # compare against the pure-JAX f32 reference (bf16 matmul tolerance)
    out_ref, w_ref = _ref_encoder(x, key_padding_mask, layer_params)
    assert float(jnp.max(jnp.abs(out - out_ref))) < 1e-1
    assert float(jnp.max(jnp.abs(weights - w_ref))) < 2e-2

    print("KERNEL_OK")
</pallas_src>

<mosaic_0001>
module attributes {stable_mosaic.version = 11 : i64} {
  func.func @kernel(%arg0: i32, %arg1: i32, %arg2: memref<1x8x32xf32, #tpu.memory_space<vmem>>, %arg3: memref<1x1x8xf32, #tpu.memory_space<vmem>>, %arg4: memref<1x32x96xbf16, #tpu.memory_space<vmem>>, %arg5: memref<1x1x96xf32, #tpu.memory_space<vmem>>, %arg6: memref<1x32x32xbf16, #tpu.memory_space<vmem>>, %arg7: memref<1x1x32xf32, #tpu.memory_space<vmem>>, %arg8: memref<1x1x32xf32, #tpu.memory_space<vmem>>, %arg9: memref<1x1x32xf32, #tpu.memory_space<vmem>>, %arg10: memref<1x32x64xbf16, #tpu.memory_space<vmem>>, %arg11: memref<1x1x64xf32, #tpu.memory_space<vmem>>, %arg12: memref<1x64x32xbf16, #tpu.memory_space<vmem>>, %arg13: memref<1x1x32xf32, #tpu.memory_space<vmem>>, %arg14: memref<1x1x32xf32, #tpu.memory_space<vmem>>, %arg15: memref<1x1x32xf32, #tpu.memory_space<vmem>>, %arg16: memref<1x8x32xf32, #tpu.memory_space<vmem>>, %arg17: memref<1x1x8x8xf32, #tpu.memory_space<vmem>>, %arg18: memref<8x32xf32, #tpu.memory_space<vmem>>) attributes {dimension_semantics = [#tpu.dimension_semantics<parallel>, #tpu.dimension_semantics<arbitrary>], iteration_bounds = array<i64: 2, 2>, scalar_prefetch = 0 : i64, scratch_operands = 1 : i64, tpu.core_type = #tpu.core_type<tc>, window_params = [{transform_indices = @transform_0, window_bounds = array<i64: 1, 8, 32>}, {transform_indices = @transform_1, window_bounds = array<i64: 1, 1, 8>}, {transform_indices = @transform_2, window_bounds = array<i64: 1, 32, 96>}, {transform_indices = @transform_3, window_bounds = array<i64: 1, 1, 96>}, {transform_indices = @transform_4, window_bounds = array<i64: 1, 32, 32>}, {transform_indices = @transform_5, window_bounds = array<i64: 1, 1, 32>}, {transform_indices = @transform_6, window_bounds = array<i64: 1, 1, 32>}, {transform_indices = @transform_7, window_bounds = array<i64: 1, 1, 32>}, {transform_indices = @transform_8, window_bounds = array<i64: 1, 32, 64>}, {transform_indices = @transform_9, window_bounds = array<i64: 1, 1, 64>}, {transform_indices = @transform_10, window_bounds = array<i64: 1, 64, 32>}, {transform_indices = @transform_11, window_bounds = array<i64: 1, 1, 32>}, {transform_indices = @transform_12, window_bounds = array<i64: 1, 1, 32>}, {transform_indices = @transform_13, window_bounds = array<i64: 1, 1, 32>}, {transform_indices = @transform_14, window_bounds = array<i64: 1, 8, 32>}, {transform_indices = @transform_15, window_bounds = array<i64: 1, 1, 8, 8>}]} {
    %c0_i32 = arith.constant 0 : i32
    %0 = arith.cmpi eq, %arg1, %c0_i32 : i32
    %1 = arith.extui %0 : i1 to i32
    %c0_i32_0 = arith.constant 0 : i32
    %2 = arith.cmpi ne, %1, %c0_i32_0 : i32
    scf.if %2 {
      %c0_92 = arith.constant 0 : index
      %c0_93 = arith.constant 0 : index
      %c0_94 = arith.constant 0 : index
      %204 = vector.load %arg2[%c0_92, %c0_93, %c0_94] : memref<1x8x32xf32, #tpu.memory_space<vmem>>, vector<1x8x32xf32>
      %c0_95 = arith.constant 0 : index
      %c0_96 = arith.constant 0 : index
      %c0_97 = arith.constant 0 : index
      %205 = vector.load %arg16[%c0_95, %c0_96, %c0_97] : memref<1x8x32xf32, #tpu.memory_space<vmem>>, vector<1x8x32xf32>
      tpu.vector_store %arg16[%c0_95, %c0_96, %c0_97], %204 {strides = array<i32>} : memref<1x8x32xf32, #tpu.memory_space<vmem>>, vector<1x8x32xf32>,
    } else {
    }
    %c0 = arith.constant 0 : index
    %c0_1 = arith.constant 0 : index
    %c0_2 = arith.constant 0 : index
    %3 = vector.load %arg16[%c0, %c0_1, %c0_2] : memref<1x8x32xf32, #tpu.memory_space<vmem>>, vector<1x8x32xf32>
    %4 = vector.shape_cast %3 : vector<1x8x32xf32> to vector<8x32xf32>
    %5 = arith.truncf %4 : vector<8x32xf32> to vector<8x32xbf16>
    %c0_3 = arith.constant 0 : index
    %c0_4 = arith.constant 0 : index
    %c0_5 = arith.constant 0 : index
    %6 = vector.load %arg4[%c0_3, %c0_4, %c0_5] : memref<1x32x96xbf16, #tpu.memory_space<vmem>>, vector<1x32x96xbf16>
    %7 = vector.shape_cast %6 : vector<1x32x96xbf16> to vector<32x96xbf16>
    %cst = arith.constant dense<0.000000e+00> : vector<8x96xf32>
    %8 = tpu.matmul %5, %7, %cst {dimension_numbers = #tpu.dot_dimension_numbers<[1], [0], [0], [1], [0, 0, 1, 1], [], []>} : vector<8x32xbf16>, vector<32x96xbf16>, vector<8x96xf32> -> vector<8x96xf32>
    %c0_6 = arith.constant 0 : index
    %c0_7 = arith.constant 0 : index
    %c0_8 = arith.constant 0 : index
    %9 = vector.load %arg5[%c0_6, %c0_7, %c0_8] : memref<1x1x96xf32, #tpu.memory_space<vmem>>, vector<1x1x96xf32>
    %10 = vector.shape_cast %9 : vector<1x1x96xf32> to vector<1x96xf32>
    %11 = vector.broadcast %10 : vector<1x96xf32> to vector<8x96xf32>
    %12 = arith.addf %8, %11 : vector<8x96xf32>
    %13 = arith.truncf %12 : vector<8x96xf32> to vector<8x96xbf16>
    %c0_9 = arith.constant 0 : index
    %c0_10 = arith.constant 0 : index
    %c0_11 = arith.constant 0 : index
    %14 = vector.load %arg3[%c0_9, %c0_10, %c0_11] : memref<1x1x8xf32, #tpu.memory_space<vmem>>, vector<1x1x8xf32>
    %cst_12 = arith.constant 0.000000e+00 : f32
    %15 = vector.broadcast %cst_12 : f32 to vector<1x8x8xf32>
    %16 = vector.extract_strided_slice %13 {offsets = [0, 0], sizes = [8, 8], strides = [1, 1]} : vector<8x96xbf16> to vector<8x8xbf16>
    %17 = vector.shape_cast %16 : vector<8x8xbf16> to vector<1x8x8xbf16>
    %18 = vector.extract_strided_slice %13 {offsets = [0, 32], sizes = [8, 8], strides = [1, 1]} : vector<8x96xbf16> to vector<8x8xbf16>
    %19 = vector.shape_cast %18 : vector<8x8xbf16> to vector<1x8x8xbf16>
    %20 = vector.extract_strided_slice %13 {offsets = [0, 64], sizes = [8, 8], strides = [1, 1]} : vector<8x96xbf16> to vector<8x8xbf16>
    %21 = vector.shape_cast %20 : vector<8x8xbf16> to vector<1x8x8xbf16>
    "tpu.trace_start"() <{level = 10 : i32, message = "bqd,bkd->bqk"}> : () -> ()
    %cst_13 = arith.constant dense<0.000000e+00> : vector<1x8x8xf32>
    %22 = tpu.matmul %17, %19, %cst_13 {dimension_numbers = #tpu.dot_dimension_numbers<[2], [2], [1], [1], [0, 0, 0, 1, 1, 1], [0], [0]>} : vector<1x8x8xbf16>, vector<1x8x8xbf16>, vector<1x8x8xf32> -> vector<1x8x8xf32>
    "tpu.trace_stop"() : () -> ()
    %23 = vector.broadcast %14 : vector<1x1x8xf32> to vector<1x8x8xf32>
    %24 = arith.addf %22, %23 : vector<1x8x8xf32>
    %cst_14 = arith.constant dense<0xFF800000> : vector<1x8xf32>
    %25 = vector.multi_reduction <maximumf>, %24, %cst_14 [2] : vector<1x8x8xf32> to vector<1x8xf32>
    %26 = vector.shape_cast %25 : vector<1x8xf32> to vector<1x8x1xf32>
    %27 = vector.broadcast %26 : vector<1x8x1xf32> to vector<1x8x8xf32>
    %28 = arith.subf %24, %27 : vector<1x8x8xf32>
    %29 = math.exp %28 : vector<1x8x8xf32>
    %cst_15 = arith.constant dense<0.000000e+00> : vector<1x8xf32>
    %30 = vector.multi_reduction <add>, %29, %cst_15 [2] : vector<1x8x8xf32> to vector<1x8xf32>
    %31 = vector.shape_cast %30 : vector<1x8xf32> to vector<1x8x1xf32>
    %cst_16 = arith.constant 1.000000e+00 : f32
    %32 = vector.broadcast %cst_16 : f32 to vector<1x8x1xf32>
    %33 = arith.divf %32, %31 : vector<1x8x1xf32>
    %34 = vector.broadcast %33 : vector<1x8x1xf32> to vector<1x8x8xf32>
    %35 = arith.mulf %29, %34 : vector<1x8x8xf32>
    %36 = arith.addf %15, %35 : vector<1x8x8xf32>
    %37 = arith.truncf %35 : vector<1x8x8xf32> to vector<1x8x8xbf16>
    "tpu.trace_start"() <{level = 10 : i32, message = "bqk,bkd->bqd"}> : () -> ()
    %cst_17 = arith.constant dense<0.000000e+00> : vector<1x8x8xf32>
    %38 = tpu.matmul %37, %21, %cst_17 {dimension_numbers = #tpu.dot_dimension_numbers<[2], [1], [1], [2], [0, 0, 0, 1, 1, 2], [0], [0]>} : vector<1x8x8xbf16>, vector<1x8x8xbf16>, vector<1x8x8xf32> -> vector<1x8x8xf32>
    "tpu.trace_stop"() : () -> ()
    %39 = vector.shape_cast %38 : vector<1x8x8xf32> to vector<8x8xf32>
    %c0_18 = arith.constant 0 : index
    %c0_19 = arith.constant 0 : index
    %40 = vector.load %arg18[%c0_18, %c0_19] : memref<8x32xf32, #tpu.memory_space<vmem>>, vector<8x8xf32>
    tpu.vector_store %arg18[%c0_18, %c0_19], %39 {strides = array<i32>} : memref<8x32xf32, #tpu.memory_space<vmem>>, vector<8x8xf32>,
    %41 = vector.extract_strided_slice %13 {offsets = [0, 8], sizes = [8, 8], strides = [1, 1]} : vector<8x96xbf16> to vector<8x8xbf16>
    %42 = vector.shape_cast %41 : vector<8x8xbf16> to vector<1x8x8xbf16>
    %43 = vector.extract_strided_slice %13 {offsets = [0, 40], sizes = [8, 8], strides = [1, 1]} : vector<8x96xbf16> to vector<8x8xbf16>
    %44 = vector.shape_cast %43 : vector<8x8xbf16> to vector<1x8x8xbf16>
    %45 = vector.extract_strided_slice %13 {offsets = [0, 72], sizes = [8, 8], strides = [1, 1]} : vector<8x96xbf16> to vector<8x8xbf16>
    %46 = vector.shape_cast %45 : vector<8x8xbf16> to vector<1x8x8xbf16>
    "tpu.trace_start"() <{level = 10 : i32, message = "bqd,bkd->bqk"}> : () -> ()
    %cst_20 = arith.constant dense<0.000000e+00> : vector<1x8x8xf32>
    %47 = tpu.matmul %42, %44, %cst_20 {dimension_numbers = #tpu.dot_dimension_numbers<[2], [2], [1], [1], [0, 0, 0, 1, 1, 1], [0], [0]>} : vector<1x8x8xbf16>, vector<1x8x8xbf16>, vector<1x8x8xf32> -> vector<1x8x8xf32>
    "tpu.trace_stop"() : () -> ()
    %48 = vector.broadcast %14 : vector<1x1x8xf32> to vector<1x8x8xf32>
    %49 = arith.addf %47, %48 : vector<1x8x8xf32>
    %cst_21 = arith.constant dense<0xFF800000> : vector<1x8xf32>
    %50 = vector.multi_reduction <maximumf>, %49, %cst_21 [2] : vector<1x8x8xf32> to vector<1x8xf32>
    %51 = vector.shape_cast %50 : vector<1x8xf32> to vector<1x8x1xf32>
    %52 = vector.broadcast %51 : vector<1x8x1xf32> to vector<1x8x8xf32>
    %53 = arith.subf %49, %52 : vector<1x8x8xf32>
    %54 = math.exp %53 : vector<1x8x8xf32>
    %cst_22 = arith.constant dense<0.000000e+00> : vector<1x8xf32>
    %55 = vector.multi_reduction <add>, %54, %cst_22 [2] : vector<1x8x8xf32> to vector<1x8xf32>
    %56 = vector.shape_cast %55 : vector<1x8xf32> to vector<1x8x1xf32>
    %cst_23 = arith.constant 1.000000e+00 : f32
    %57 = vector.broadcast %cst_23 : f32 to vector<1x8x1xf32>
    %58 = arith.divf %57, %56 : vector<1x8x1xf32>
    %59 = vector.broadcast %58 : vector<1x8x1xf32> to vector<1x8x8xf32>
    %60 = arith.mulf %54, %59 : vector<1x8x8xf32>
    %61 = arith.addf %36, %60 : vector<1x8x8xf32>
    %62 = arith.truncf %60 : vector<1x8x8xf32> to vector<1x8x8xbf16>
    "tpu.trace_start"() <{level = 10 : i32, message = "bqk,bkd->bqd"}> : () -> ()
    %cst_24 = arith.constant dense<0.000000e+00> : vector<1x8x8xf32>
    %63 = tpu.matmul %62, %46, %cst_24 {dimension_numbers = #tpu.dot_dimension_numbers<[2], [1], [1], [2], [0, 0, 0, 1, 1, 2], [0], [0]>} : vector<1x8x8xbf16>, vector<1x8x8xbf16>, vector<1x8x8xf32> -> vector<1x8x8xf32>
    "tpu.trace_stop"() : () -> ()
    %64 = vector.shape_cast %63 : vector<1x8x8xf32> to vector<8x8xf32>
    %c0_25 = arith.constant 0 : index
    %c8 = arith.constant 8 : index
    %65 = vector.load %arg18[%c0_25, %c8] : memref<8x32xf32, #tpu.memory_space<vmem>>, vector<8x8xf32>
    tpu.vector_store %arg18[%c0_25, %c8], %64 {strides = array<i32>} : memref<8x32xf32, #tpu.memory_space<vmem>>, vector<8x8xf32>,
    %66 = vector.extract_strided_slice %13 {offsets = [0, 16], sizes = [8, 8], strides = [1, 1]} : vector<8x96xbf16> to vector<8x8xbf16>
    %67 = vector.shape_cast %66 : vector<8x8xbf16> to vector<1x8x8xbf16>
    %68 = vector.extract_strided_slice %13 {offsets = [0, 48], sizes = [8, 8], strides = [1, 1]} : vector<8x96xbf16> to vector<8x8xbf16>
    %69 = vector.shape_cast %68 : vector<8x8xbf16> to vector<1x8x8xbf16>
    %70 = vector.extract_strided_slice %13 {offsets = [0, 80], sizes = [8, 8], strides = [1, 1]} : vector<8x96xbf16> to vector<8x8xbf16>
    %71 = vector.shape_cast %70 : vector<8x8xbf16> to vector<1x8x8xbf16>
    "tpu.trace_start"() <{level = 10 : i32, message = "bqd,bkd->bqk"}> : () -> ()
    %cst_26 = arith.constant dense<0.000000e+00> : vector<1x8x8xf32>
    %72 = tpu.matmul %67, %69, %cst_26 {dimension_numbers = #tpu.dot_dimension_numbers<[2], [2], [1], [1], [0, 0, 0, 1, 1, 1], [0], [0]>} : vector<1x8x8xbf16>, vector<1x8x8xbf16>, vector<1x8x8xf32> -> vector<1x8x8xf32>
    "tpu.trace_stop"() : () -> ()
    %73 = vector.broadcast %14 : vector<1x1x8xf32> to vector<1x8x8xf32>
    %74 = arith.addf %72, %73 : vector<1x8x8xf32>
    %cst_27 = arith.constant dense<0xFF800000> : vector<1x8xf32>
    %75 = vector.multi_reduction <maximumf>, %74, %cst_27 [2] : vector<1x8x8xf32> to vector<1x8xf32>
    %76 = vector.shape_cast %75 : vector<1x8xf32> to vector<1x8x1xf32>
    %77 = vector.broadcast %76 : vector<1x8x1xf32> to vector<1x8x8xf32>
    %78 = arith.subf %74, %77 : vector<1x8x8xf32>
    %79 = math.exp %78 : vector<1x8x8xf32>
    %cst_28 = arith.constant dense<0.000000e+00> : vector<1x8xf32>
    %80 = vector.multi_reduction <add>, %79, %cst_28 [2] : vector<1x8x8xf32> to vector<1x8xf32>
    %81 = vector.shape_cast %80 : vector<1x8xf32> to vector<1x8x1xf32>
    %cst_29 = arith.constant 1.000000e+00 : f32
    %82 = vector.broadcast %cst_29 : f32 to vector<1x8x1xf32>
    %83 = arith.divf %82, %81 : vector<1x8x1xf32>
    %84 = vector.broadcast %83 : vector<1x8x1xf32> to vector<1x8x8xf32>
    %85 = arith.mulf %79, %84 : vector<1x8x8xf32>
    %86 = arith.addf %61, %85 : vector<1x8x8xf32>
    %87 = arith.truncf %85 : vector<1x8x8xf32> to vector<1x8x8xbf16>
    "tpu.trace_start"() <{level = 10 : i32, message = "bqk,bkd->bqd"}> : () -> ()
    %cst_30 = arith.constant dense<0.000000e+00> : vector<1x8x8xf32>
    %88 = tpu.matmul %87, %71, %cst_30 {dimension_numbers = #tpu.dot_dimension_numbers<[2], [1], [1], [2], [0, 0, 0, 1, 1, 2], [0], [0]>} : vector<1x8x8xbf16>, vector<1x8x8xbf16>, vector<1x8x8xf32> -> vector<1x8x8xf32>
    "tpu.trace_stop"() : () -> ()
    %89 = vector.shape_cast %88 : vector<1x8x8xf32> to vector<8x8xf32>
    %c0_31 = arith.constant 0 : index
    %c16 = arith.constant 16 : index
    %90 = vector.load %arg18[%c0_31, %c16] : memref<8x32xf32, #tpu.memory_space<vmem>>, vector<8x8xf32>
    tpu.vector_store %arg18[%c0_31, %c16], %89 {strides = array<i32>} : memref<8x32xf32, #tpu.memory_space<vmem>>, vector<8x8xf32>,
    %91 = vector.extract_strided_slice %13 {offsets = [0, 24], sizes = [8, 8], strides = [1, 1]} : vector<8x96xbf16> to vector<8x8xbf16>
    %92 = vector.shape_cast %91 : vector<8x8xbf16> to vector<1x8x8xbf16>
    %93 = vector.extract_strided_slice %13 {offsets = [0, 56], sizes = [8, 8], strides = [1, 1]} : vector<8x96xbf16> to vector<8x8xbf16>
    %94 = vector.shape_cast %93 : vector<8x8xbf16> to vector<1x8x8xbf16>
    %95 = vector.extract_strided_slice %13 {offsets = [0, 88], sizes = [8, 8], strides = [1, 1]} : vector<8x96xbf16> to vector<8x8xbf16>
    %96 = vector.shape_cast %95 : vector<8x8xbf16> to vector<1x8x8xbf16>
    "tpu.trace_start"() <{level = 10 : i32, message = "bqd,bkd->bqk"}> : () -> ()
    %cst_32 = arith.constant dense<0.000000e+00> : vector<1x8x8xf32>
    %97 = tpu.matmul %92, %94, %cst_32 {dimension_numbers = #tpu.dot_dimension_numbers<[2], [2], [1], [1], [0, 0, 0, 1, 1, 1], [0], [0]>} : vector<1x8x8xbf16>, vector<1x8x8xbf16>, vector<1x8x8xf32> -> vector<1x8x8xf32>
    "tpu.trace_stop"() : () -> ()
    %98 = vector.broadcast %14 : vector<1x1x8xf32> to vector<1x8x8xf32>
    %99 = arith.addf %97, %98 : vector<1x8x8xf32>
    %cst_33 = arith.constant dense<0xFF800000> : vector<1x8xf32>
    %100 = vector.multi_reduction <maximumf>, %99, %cst_33 [2] : vector<1x8x8xf32> to vector<1x8xf32>
    %101 = vector.shape_cast %100 : vector<1x8xf32> to vector<1x8x1xf32>
    %102 = vector.broadcast %101 : vector<1x8x1xf32> to vector<1x8x8xf32>
    %103 = arith.subf %99, %102 : vector<1x8x8xf32>
    %104 = math.exp %103 : vector<1x8x8xf32>
    %cst_34 = arith.constant dense<0.000000e+00> : vector<1x8xf32>
    %105 = vector.multi_reduction <add>, %104, %cst_34 [2] : vector<1x8x8xf32> to vector<1x8xf32>
    %106 = vector.shape_cast %105 : vector<1x8xf32> to vector<1x8x1xf32>
    %cst_35 = arith.constant 1.000000e+00 : f32
    %107 = vector.broadcast %cst_35 : f32 to vector<1x8x1xf32>
    %108 = arith.divf %107, %106 : vector<1x8x1xf32>
    %109 = vector.broadcast %108 : vector<1x8x1xf32> to vector<1x8x8xf32>
    %110 = arith.mulf %104, %109 : vector<1x8x8xf32>
    %111 = arith.addf %86, %110 : vector<1x8x8xf32>
    %112 = arith.truncf %110 : vector<1x8x8xf32> to vector<1x8x8xbf16>
    "tpu.trace_start"() <{level = 10 : i32, message = "bqk,bkd->bqd"}> : () -> ()
    %cst_36 = arith.constant dense<0.000000e+00> : vector<1x8x8xf32>
    %113 = tpu.matmul %112, %96, %cst_36 {dimension_numbers = #tpu.dot_dimension_numbers<[2], [1], [1], [2], [0, 0, 0, 1, 1, 2], [0], [0]>} : vector<1x8x8xbf16>, vector<1x8x8xbf16>, vector<1x8x8xf32> -> vector<1x8x8xf32>
    "tpu.trace_stop"() : () -> ()
    %114 = vector.shape_cast %113 : vector<1x8x8xf32> to vector<8x8xf32>
    %c0_37 = arith.constant 0 : index
    %c24 = arith.constant 24 : index
    %115 = vector.load %arg18[%c0_37, %c24] : memref<8x32xf32, #tpu.memory_space<vmem>>, vector<8x8xf32>
    tpu.vector_store %arg18[%c0_37, %c24], %114 {strides = array<i32>} : memref<8x32xf32, #tpu.memory_space<vmem>>, vector<8x8xf32>,
    %c0_38 = arith.constant 0 : index
    %c0_39 = arith.constant 0 : index
    %116 = vector.load %arg18[%c0_38, %c0_39] : memref<8x32xf32, #tpu.memory_space<vmem>>, vector<8x32xf32>
    %117 = arith.truncf %116 : vector<8x32xf32> to vector<8x32xbf16>
    %c0_40 = arith.constant 0 : index
    %c0_41 = arith.constant 0 : index
    %c0_42 = arith.constant 0 : index
    %118 = vector.load %arg6[%c0_40, %c0_41, %c0_42] : memref<1x32x32xbf16, #tpu.memory_space<vmem>>, vector<1x32x32xbf16>
    %119 = vector.shape_cast %118 : vector<1x32x32xbf16> to vector<32x32xbf16>
    %cst_43 = arith.constant dense<0.000000e+00> : vector<8x32xf32>
    %120 = tpu.matmul %117, %119, %cst_43 {dimension_numbers = #tpu.dot_dimension_numbers<[1], [0], [0], [1], [0, 0, 1, 1], [], []>} : vector<8x32xbf16>, vector<32x32xbf16>, vector<8x32xf32> -> vector<8x32xf32>
    %c0_44 = arith.constant 0 : index
    %c0_45 = arith.constant 0 : index
    %c0_46 = arith.constant 0 : index
    %121 = vector.load %arg7[%c0_44, %c0_45, %c0_46] : memref<1x1x32xf32, #tpu.memory_space<vmem>>, vector<1x1x32xf32>
    %122 = vector.shape_cast %121 : vector<1x1x32xf32> to vector<1x32xf32>
    %123 = vector.broadcast %122 : vector<1x32xf32> to vector<8x32xf32>
    %124 = arith.addf %120, %123 : vector<8x32xf32>
    %125 = arith.addf %4, %124 : vector<8x32xf32>
    %c0_47 = arith.constant 0 : index
    %c0_48 = arith.constant 0 : index
    %c0_49 = arith.constant 0 : index
    %126 = vector.load %arg8[%c0_47, %c0_48, %c0_49] : memref<1x1x32xf32, #tpu.memory_space<vmem>>, vector<1x1x32xf32>
    %127 = vector.shape_cast %126 : vector<1x1x32xf32> to vector<1x32xf32>
    %c0_50 = arith.constant 0 : index
    %c0_51 = arith.constant 0 : index
    %c0_52 = arith.constant 0 : index
    %128 = vector.load %arg9[%c0_50, %c0_51, %c0_52] : memref<1x1x32xf32, #tpu.memory_space<vmem>>, vector<1x1x32xf32>
    %129 = vector.shape_cast %128 : vector<1x1x32xf32> to vector<1x32xf32>
    %cst_53 = arith.constant dense<0.000000e+00> : vector<8xf32>
    %130 = vector.multi_reduction <add>, %125, %cst_53 [1] : vector<8x32xf32> to vector<8xf32>
    %131 = vector.shape_cast %130 : vector<8xf32> to vector<8x1xf32>
    %cst_54 = arith.constant 3.200000e+01 : f32
    %132 = vector.broadcast %cst_54 : f32 to vector<8x1xf32>
    %133 = arith.divf %131, %132 : vector<8x1xf32>
    %134 = vector.broadcast %133 : vector<8x1xf32> to vector<8x32xf32>
    %135 = arith.subf %125, %134 : vector<8x32xf32>
    %136 = arith.mulf %135, %135 : vector<8x32xf32>
    %cst_55 = arith.constant dense<0.000000e+00> : vector<8xf32>
    %137 = vector.multi_reduction <add>, %136, %cst_55 [1] : vector<8x32xf32> to vector<8xf32>
    %138 = vector.shape_cast %137 : vector<8xf32> to vector<8x1xf32>
    %cst_56 = arith.constant 3.200000e+01 : f32
    %139 = vector.broadcast %cst_56 : f32 to vector<8x1xf32>
    %140 = arith.divf %138, %139 : vector<8x1xf32>
    %141 = vector.broadcast %133 : vector<8x1xf32> to vector<8x32xf32>
    %142 = arith.subf %125, %141 : vector<8x32xf32>
    %cst_57 = arith.constant 9.99999974E-6 : f32
    %143 = vector.broadcast %cst_57 : f32 to vector<8x1xf32>
    %144 = arith.addf %140, %143 : vector<8x1xf32>
    %145 = math.rsqrt %144 : vector<8x1xf32>
    %146 = vector.broadcast %145 : vector<8x1xf32> to vector<8x32xf32>
    %147 = arith.mulf %142, %146 : vector<8x32xf32>
    %148 = vector.broadcast %127 : vector<1x32xf32> to vector<8x32xf32>
    %149 = arith.mulf %147, %148 : vector<8x32xf32>
    %150 = vector.broadcast %129 : vector<1x32xf32> to vector<8x32xf32>
    %151 = arith.addf %149, %150 : vector<8x32xf32>
    %152 = arith.truncf %151 : vector<8x32xf32> to vector<8x32xbf16>
    %c0_58 = arith.constant 0 : index
    %c0_59 = arith.constant 0 : index
    %c0_60 = arith.constant 0 : index
    %153 = vector.load %arg10[%c0_58, %c0_59, %c0_60] : memref<1x32x64xbf16, #tpu.memory_space<vmem>>, vector<1x32x64xbf16>
    %154 = vector.shape_cast %153 : vector<1x32x64xbf16> to vector<32x64xbf16>
    %cst_61 = arith.constant dense<0.000000e+00> : vector<8x64xf32>
    %155 = tpu.matmul %152, %154, %cst_61 {dimension_numbers = #tpu.dot_dimension_numbers<[1], [0], [0], [1], [0, 0, 1, 1], [], []>} : vector<8x32xbf16>, vector<32x64xbf16>, vector<8x64xf32> -> vector<8x64xf32>
    %c0_62 = arith.constant 0 : index
    %c0_63 = arith.constant 0 : index
    %c0_64 = arith.constant 0 : index
    %156 = vector.load %arg11[%c0_62, %c0_63, %c0_64] : memref<1x1x64xf32, #tpu.memory_space<vmem>>, vector<1x1x64xf32>
    %157 = vector.shape_cast %156 : vector<1x1x64xf32> to vector<1x64xf32>
    %158 = vector.broadcast %157 : vector<1x64xf32> to vector<8x64xf32>
    %159 = arith.addf %155, %158 : vector<8x64xf32>
    %cst_65 = arith.constant 0.000000e+00 : f32
    %160 = vector.broadcast %cst_65 : f32 to vector<8x64xf32>
    %161 = arith.maximumf %159, %160 : vector<8x64xf32>
    %162 = arith.truncf %161 : vector<8x64xf32> to vector<8x64xbf16>
    %c0_66 = arith.constant 0 : index
    %c0_67 = arith.constant 0 : index
    %c0_68 = arith.constant 0 : index
    %163 = vector.load %arg12[%c0_66, %c0_67, %c0_68] : memref<1x64x32xbf16, #tpu.memory_space<vmem>>, vector<1x64x32xbf16>
    %164 = vector.shape_cast %163 : vector<1x64x32xbf16> to vector<64x32xbf16>
    %cst_69 = arith.constant dense<0.000000e+00> : vector<8x32xf32>
    %165 = tpu.matmul %162, %164, %cst_69 {dimension_numbers = #tpu.dot_dimension_numbers<[1], [0], [0], [1], [0, 0, 1, 1], [], []>} : vector<8x64xbf16>, vector<64x32xbf16>, vector<8x32xf32> -> vector<8x32xf32>
    %c0_70 = arith.constant 0 : index
    %c0_71 = arith.constant 0 : index
    %c0_72 = arith.constant 0 : index
    %166 = vector.load %arg13[%c0_70, %c0_71, %c0_72] : memref<1x1x32xf32, #tpu.memory_space<vmem>>, vector<1x1x32xf32>
    %167 = vector.shape_cast %166 : vector<1x1x32xf32> to vector<1x32xf32>
    %168 = vector.broadcast %167 : vector<1x32xf32> to vector<8x32xf32>
    %169 = arith.addf %165, %168 : vector<8x32xf32>
    %170 = arith.addf %151, %169 : vector<8x32xf32>
    %c0_73 = arith.constant 0 : index
    %c0_74 = arith.constant 0 : index
    %c0_75 = arith.constant 0 : index
    %171 = vector.load %arg14[%c0_73, %c0_74, %c0_75] : memref<1x1x32xf32, #tpu.memory_space<vmem>>, vector<1x1x32xf32>
    %172 = vector.shape_cast %171 : vector<1x1x32xf32> to vector<1x32xf32>
    %c0_76 = arith.constant 0 : index
    %c0_77 = arith.constant 0 : index
    %c0_78 = arith.constant 0 : index
    %173 = vector.load %arg15[%c0_76, %c0_77, %c0_78] : memref<1x1x32xf32, #tpu.memory_space<vmem>>, vector<1x1x32xf32>
    %174 = vector.shape_cast %173 : vector<1x1x32xf32> to vector<1x32xf32>
    %cst_79 = arith.constant dense<0.000000e+00> : vector<8xf32>
    %175 = vector.multi_reduction <add>, %170, %cst_79 [1] : vector<8x32xf32> to vector<8xf32>
    %176 = vector.shape_cast %175 : vector<8xf32> to vector<8x1xf32>
    %cst_80 = arith.constant 3.200000e+01 : f32
    %177 = vector.broadcast %cst_80 : f32 to vector<8x1xf32>
    %178 = arith.divf %176, %177 : vector<8x1xf32>
    %179 = vector.broadcast %178 : vector<8x1xf32> to vector<8x32xf32>
    %180 = arith.subf %170, %179 : vector<8x32xf32>
    %181 = arith.mulf %180, %180 : vector<8x32xf32>
    %cst_81 = arith.constant dense<0.000000e+00> : vector<8xf32>
    %182 = vector.multi_reduction <add>, %181, %cst_81 [1] : vector<8x32xf32> to vector<8xf32>
    %183 = vector.shape_cast %182 : vector<8xf32> to vector<8x1xf32>
    %cst_82 = arith.constant 3.200000e+01 : f32
    %184 = vector.broadcast %cst_82 : f32 to vector<8x1xf32>
    %185 = arith.divf %183, %184 : vector<8x1xf32>
    %186 = vector.broadcast %178 : vector<8x1xf32> to vector<8x32xf32>
    %187 = arith.subf %170, %186 : vector<8x32xf32>
    %cst_83 = arith.constant 9.99999974E-6 : f32
    %188 = vector.broadcast %cst_83 : f32 to vector<8x1xf32>
    %189 = arith.addf %185, %188 : vector<8x1xf32>
    %190 = math.rsqrt %189 : vector<8x1xf32>
    %191 = vector.broadcast %190 : vector<8x1xf32> to vector<8x32xf32>
    %192 = arith.mulf %187, %191 : vector<8x32xf32>
    %193 = vector.broadcast %172 : vector<1x32xf32> to vector<8x32xf32>
    %194 = arith.mulf %192, %193 : vector<8x32xf32>
    %195 = vector.broadcast %174 : vector<1x32xf32> to vector<8x32xf32>
    %196 = arith.addf %194, %195 : vector<8x32xf32>
    %197 = vector.shape_cast %196 : vector<8x32xf32> to vector<1x8x32xf32>
    %c0_84 = arith.constant 0 : index
    %c0_85 = arith.constant 0 : index
    %c0_86 = arith.constant 0 : index
    %198 = vector.load %arg16[%c0_84, %c0_85, %c0_86] : memref<1x8x32xf32, #tpu.memory_space<vmem>>, vector<1x8x32xf32>
    tpu.vector_store %arg16[%c0_84, %c0_85, %c0_86], %197 {strides = array<i32>} : memref<1x8x32xf32, #tpu.memory_space<vmem>>, vector<1x8x32xf32>,
    %cst_87 = arith.constant 2.500000e-01 : f32
    %199 = vector.broadcast %cst_87 : f32 to vector<1x8x8xf32>
    %200 = arith.mulf %111, %199 : vector<1x8x8xf32>
    %c0_88 = arith.constant 0 : index
    %c0_89 = arith.constant 0 : index
    %c0_90 = arith.constant 0 : index
    %c0_91 = arith.constant 0 : index
    %201 = vector.load %arg17[%c0_88, %c0_89, %c0_90, %c0_91] : memref<1x1x8x8xf32, #tpu.memory_space<vmem>>, vector<1x1x8x8xf32>
    %202 = vector.shape_cast %201 : vector<1x1x8x8xf32> to vector<1x8x8xf32>
    %203 = vector.shape_cast %200 : vector<1x8x8xf32> to vector<1x1x8x8xf32>
    tpu.vector_store %arg17[%c0_88, %c0_89, %c0_90, %c0_91], %203 {strides = array<i32>} : memref<1x1x8x8xf32, #tpu.memory_space<vmem>>, vector<1x1x8x8xf32>,
    return
  }
  func.func @transform_0(%arg0: i32, %arg1: i32) -> (i32, i32, i32) {
    %c0_i32 = arith.constant 0 : i32
    %c0_i32_0 = arith.constant 0 : i32
    %c0_i32_1 = arith.constant 0 : i32
    return %arg0, %c0_i32, %c0_i32_0 : i32, i32, i32
  }
  func.func @transform_1(%arg0: i32, %arg1: i32) -> (i32, i32, i32) {
    %c0_i32 = arith.constant 0 : i32
    %c0_i32_0 = arith.constant 0 : i32
    %c0_i32_1 = arith.constant 0 : i32
    return %arg0, %c0_i32, %c0_i32_0 : i32, i32, i32
  }
  func.func @transform_2(%arg0: i32, %arg1: i32) -> (i32, i32, i32) {
    %c0_i32 = arith.constant 0 : i32
    %c0_i32_0 = arith.constant 0 : i32
    %c0_i32_1 = arith.constant 0 : i32
    return %arg1, %c0_i32, %c0_i32_0 : i32, i32, i32
  }
  func.func @transform_3(%arg0: i32, %arg1: i32) -> (i32, i32, i32) {
    %c0_i32 = arith.constant 0 : i32
    %c0_i32_0 = arith.constant 0 : i32
    %c0_i32_1 = arith.constant 0 : i32
    return %arg1, %c0_i32, %c0_i32_0 : i32, i32, i32
  }
  func.func @transform_4(%arg0: i32, %arg1: i32) -> (i32, i32, i32) {
    %c0_i32 = arith.constant 0 : i32
    %c0_i32_0 = arith.constant 0 : i32
    %c0_i32_1 = arith.constant 0 : i32
    return %arg1, %c0_i32, %c0_i32_0 : i32, i32, i32
  }
  func.func @transform_5(%arg0: i32, %arg1: i32) -> (i32, i32, i32) {
    %c0_i32 = arith.constant 0 : i32
    %c0_i32_0 = arith.constant 0 : i32
    %c0_i32_1 = arith.constant 0 : i32
    return %arg1, %c0_i32, %c0_i32_0 : i32, i32, i32
  }
  func.func @transform_6(%arg0: i32, %arg1: i32) -> (i32, i32, i32) {
    %c0_i32 = arith.constant 0 : i32
    %c0_i32_0 = arith.constant 0 : i32
    %c0_i32_1 = arith.constant 0 : i32
    return %arg1, %c0_i32, %c0_i32_0 : i32, i32, i32
  }
  func.func @transform_7(%arg0: i32, %arg1: i32) -> (i32, i32, i32) {
    %c0_i32 = arith.constant 0 : i32
    %c0_i32_0 = arith.constant 0 : i32
    %c0_i32_1 = arith.constant 0 : i32
    return %arg1, %c0_i32, %c0_i32_0 : i32, i32, i32
  }
  func.func @transform_8(%arg0: i32, %arg1: i32) -> (i32, i32, i32) {
    %c0_i32 = arith.constant 0 : i32
    %c0_i32_0 = arith.constant 0 : i32
    %c0_i32_1 = arith.constant 0 : i32
    return %arg1, %c0_i32, %c0_i32_0 : i32, i32, i32
  }
  func.func @transform_9(%arg0: i32, %arg1: i32) -> (i32, i32, i32) {
    %c0_i32 = arith.constant 0 : i32
    %c0_i32_0 = arith.constant 0 : i32
    %c0_i32_1 = arith.constant 0 : i32
    return %arg1, %c0_i32, %c0_i32_0 : i32, i32, i32
  }
  func.func @transform_10(%arg0: i32, %arg1: i32) -> (i32, i32, i32) {
    %c0_i32 = arith.constant 0 : i32
    %c0_i32_0 = arith.constant 0 : i32
    %c0_i32_1 = arith.constant 0 : i32
    return %arg1, %c0_i32, %c0_i32_0 : i32, i32, i32
  }
  func.func @transform_11(%arg0: i32, %arg1: i32) -> (i32, i32, i32) {
    %c0_i32 = arith.constant 0 : i32
    %c0_i32_0 = arith.constant 0 : i32
    %c0_i32_1 = arith.constant 0 : i32
    return %arg1, %c0_i32, %c0_i32_0 : i32, i32, i32
  }
  func.func @transform_12(%arg0: i32, %arg1: i32) -> (i32, i32, i32) {
    %c0_i32 = arith.constant 0 : i32
    %c0_i32_0 = arith.constant 0 : i32
    %c0_i32_1 = arith.constant 0 : i32
    return %arg1, %c0_i32, %c0_i32_0 : i32, i32, i32
  }
  func.func @transform_13(%arg0: i32, %arg1: i32) -> (i32, i32, i32) {
    %c0_i32 = arith.constant 0 : i32
    %c0_i32_0 = arith.constant 0 : i32
    %c0_i32_1 = arith.constant 0 : i32
    return %arg1, %c0_i32, %c0_i32_0 : i32, i32, i32
  }
  func.func @transform_14(%arg0: i32, %arg1: i32) -> (i32, i32, i32) {
    %c0_i32 = arith.constant 0 : i32
    %c0_i32_0 = arith.constant 0 : i32
    %c0_i32_1 = arith.constant 0 : i32
    return %arg0, %c0_i32, %c0_i32_0 : i32, i32, i32
  }
  func.func @transform_15(%arg0: i32, %arg1: i32) -> (i32, i32, i32, i32) {
    %c0_i32 = arith.constant 0 : i32
    %c0_i32_0 = arith.constant 0 : i32
    %c0_i32_1 = arith.constant 0 : i32
    return %arg1, %arg0, %c0_i32, %c0_i32_0 : i32, i32, i32, i32
  }
}

</mosaic_0001>

<llo_original>
// kernel: transformer_encoder.1
$region0: #{transformer_encoder.1}
  #allocation0 [shape = 'u32[]', space=smem, size = 0x4, offset = 0x4, fixed_abs, tag = 'smem constant byte address 0x4 - core index']
  #allocation1 [shape = 'u32[144,128]{1,0:T(1,128)}', space=vmem, size = 0x12000, scoped, tag = 'internal scratch']
  #allocation2 [shape = 'f32[8,32]{1,0:T(8,128)}', space=vmem, size = 0x1000, scoped, tag = 'scratch operand']
  %s0 = inlined_call_operand.vmem [shape: f32[2,8,32], index: 0, kind: input, shape index: {}, may-alias: {0,14}]
  %s1 = inlined_call_operand.vmem [shape: f32[2,1,8], index: 1, kind: input, shape index: {}]
  %s2 = inlined_call_operand.vmem [shape: bf16[2,32,96], index: 2, kind: input, shape index: {}]
  %s3 = inlined_call_operand.vmem [shape: f32[2,1,96], index: 3, kind: input, shape index: {}]
  %s4 = inlined_call_operand.vmem [shape: bf16[2,32,32], index: 4, kind: input, shape index: {}]
  %s5 = inlined_call_operand.vmem [shape: f32[2,1,32], index: 5, kind: input, shape index: {}]
  %s6 = inlined_call_operand.vmem [shape: f32[2,1,32], index: 6, kind: input, shape index: {}]
  %s7 = inlined_call_operand.vmem [shape: f32[2,1,32], index: 7, kind: input, shape index: {}]
  %s8 = inlined_call_operand.vmem [shape: bf16[2,32,64], index: 8, kind: input, shape index: {}]
  %s9 = inlined_call_operand.vmem [shape: f32[2,1,64], index: 9, kind: input, shape index: {}]
  %s10 = inlined_call_operand.vmem [shape: bf16[2,64,32], index: 10, kind: input, shape index: {}]
  %s11 = inlined_call_operand.vmem [shape: f32[2,1,32], index: 11, kind: input, shape index: {}]
  %s12 = inlined_call_operand.vmem [shape: f32[2,1,32], index: 12, kind: input, shape index: {}]
  %s13 = inlined_call_operand.vmem [shape: f32[2,1,32], index: 13, kind: input, shape index: {}]
  %s14 = inlined_call_operand.vmem [shape: f32[2,8,32], index: 14, kind: output, shape index: {0}, may-alias: {0,14}]
  %s15 = inlined_call_operand.hbm [shape: f32[2,2,8,8], index: 15, kind: output, shape index: {1}]
  %16 = xla_tuple %s14, %s15
  %s17 = sld [smem:[#allocation0]]
  $region101: #{transformer_encoder.1} parent=0
    _
  %s19 = ssub.s32 1, %s17
  %s20 = scalar_select 0, %s19, %s17
  $region1: #{transformer_encoder.1} parent=0
    #allocation3 [shape = 'u8[8192]{0}', space=vmem, size = 0x2000, scoped, tag = 'output window, operand 1']
    #allocation4 [shape = 's32[2]{0}', space=sflag, size = 0x8, scoped, tag = 'scoped memory for transformer_encoder.1']
    %21 = vsyncpa [#allocation4], 0
    %s22 = scalar_lea.sflag [#allocation4], 1
    %23 = vsyncpa %s22, 0
    loop: start=0, step=1, limit=6
    $region2: #{transformer_encoder.1} parent=1 // loop_pre_header
      _
    $region3: #{transformer_encoder.1} parent=1 // loop_header
      %s25 = sphi 0, %s29
      %p26 = scmp.ge.s32.totalorder %s25, 6
      %s32 = sphi 0, %s44
      %s33 = sphi 0, %s40
      %s34 = sphi 0, %s32
      %s35 = sphi 0, %s33
      %s36 = sphi 0, %s34
      %s37 = sphi 0, %s35
      %s47 = sphi 0, %s49
      %s50 = sphi 0, %s47
      %s51 = sphi 0, %s50
      %s67 = sphi 0, %s51
      %s73 = sphi 0, %s75
      %s76 = sphi 0, %s73
      %s77 = sphi 0, %s76
      %s93 = sphi 0, %s77
      %s99 = sphi 0, %s101
      %s102 = sphi 0, %s99
      %s103 = sphi 0, %s102
      %s119 = sphi 0, %s103
      %s125 = sphi 0, %s127
      %s128 = sphi 0, %s125
      %s129 = sphi 0, %s128
      %s145 = sphi 0, %s129
      %s151 = sphi 0, %s153
      %s154 = sphi 0, %s151
      %s155 = sphi 0, %s154
      %s171 = sphi 0, %s155
      %s177 = sphi 0, %s179
      %s180 = sphi 0, %s177
      %s181 = sphi 0, %s180
      %s197 = sphi 0, %s181
      %s203 = sphi 0, %s205
      %s206 = sphi 0, %s203
      %s207 = sphi 0, %s206
      %s223 = sphi 0, %s207
      %s229 = sphi 0, %s231
      %s232 = sphi 0, %s229
      %s233 = sphi 0, %s232
      %s249 = sphi 0, %s233
      %s255 = sphi 0, %s257
      %s258 = sphi 0, %s255
      %s259 = sphi 0, %s258
      %s275 = sphi 0, %s259
      %s281 = sphi 0, %s283
      %s284 = sphi 0, %s281
      %s285 = sphi 0, %s284
      %s301 = sphi 0, %s285
      %s307 = sphi 0, %s309
      %s310 = sphi 0, %s307
      %s311 = sphi 0, %s310
      %s327 = sphi 0, %s311
      %s333 = sphi 0, %s335
      %s336 = sphi 0, %s333
      %s337 = sphi 0, %s336
      %s353 = sphi 0, %s337
      %s359 = sphi 0, %s361
      %s362 = sphi 0, %s359
      %s363 = sphi 0, %s362
      %s379 = sphi 0, %s363
      %s385 = sphi 0, %s387
      %s388 = sphi 0, %s385
      %s389 = sphi 0, %s388
      %s405 = sphi 0, %s389
      %s411 = sphi 0, %s413
      %s414 = sphi 0, %s411
      %s415 = sphi 0, %s414
      %s431 = sphi 0, %s415
      %s439 = sphi 0, %s441
      %s442 = sphi 0, %s439
      %s443 = sphi 0, %s442
      %s459 = sphi 0, %s443
    $region4: #{transformer_encoder.1} parent=1 // loop_header_branch
      %28 = sbr.rel (%p26) target = $region8
    $region5: #{transformer_encoder.1} parent=1 // loop_body
      %s30 = ssub.s32 %s25, 1
      %s31 = ssub.s32 %s25, 2
      %s38 = sadd.s32 1, %s33
      %p39 = scmp.ge.s32.totalorder %s38, 2
      %s40 = scalar_select %p39, 0, %s38
      %s41 = sadd.s32 1, %s32
      %s42 = scalar_select %p39, %s41, %s32
      %p43 = scmp.ge.s32.totalorder %s42, 2
      %s44 = scalar_select %p43, 0, %s42
      %s45 = ssub.s32 %s32, %s44
      %p46 = scmp.eq.s32.totalorder %s45, 0
      %s48 = sadd.s32 %s47, 1
      %s49 = scalar_select %p46, %s47, %s48
      %p52 = pneg %p46
      %p53 = scmp.eq.s32.totalorder %s25, 3
      %p54 = por %p52, %p53
      %p55 = scmp.ne.s32.totalorder %s47, %s50
      %p56 = scmp.eq.s32.totalorder %s25, 0
      %p57 = por %p55, %p56
      %p58 = scmp.ne.s32.totalorder %s47, %s50
      %p59 = scmp.eq.s32.totalorder %s30, 3
      %p60 = por %p58, %p59
      %p61 = scmp.ne.s32.totalorder %s50, %s51
      %p62 = scmp.eq.s32.totalorder %s30, 0
      %p63 = por %p61, %p62
      %p64 = scmp.ne.s32.totalorder %s50, %s51
      %p65 = scmp.eq.s32.totalorder %s31, 3
      %p66 = por %p64, %p65
      %p68 = scmp.ne.s32.totalorder %s51, %s67
      %p69 = scmp.eq.s32.totalorder %s31, 0
      %p70 = por %p68, %p69
      %s71 = ssub.s32 %s32, %s44
      %p72 = scmp.eq.s32.totalorder %s71, 0
      %s74 = sadd.s32 %s73, 1
      %s75 = scalar_select %p72, %s73, %s74
      %p78 = pneg %p72
      %p79 = scmp.eq.s32.totalorder %s25, 3
      %p80 = por %p78, %p79
      %p81 = scmp.ne.s32.totalorder %s73, %s76
      %p82 = scmp.eq.s32.totalorder %s25, 0
      %p83 = por %p81, %p82
      %p84 = scmp.ne.s32.totalorder %s73, %s76
      %p85 = scmp.eq.s32.totalorder %s30, 3
      %p86 = por %p84, %p85
      %p87 = scmp.ne.s32.totalorder %s76, %s77
      %p88 = scmp.eq.s32.totalorder %s30, 0
      %p89 = por %p87, %p88
      %p90 = scmp.ne.s32.totalorder %s76, %s77
      %p91 = scmp.eq.s32.totalorder %s31, 3
      %p92 = por %p90, %p91
      %p94 = scmp.ne.s32.totalorder %s77, %s93
      %p95 = scmp.eq.s32.totalorder %s31, 0
      %p96 = por %p94, %p95
      %s97 = ssub.s32 %s33, %s40
      %p98 = scmp.eq.s32.totalorder %s97, 0
      %s100 = sadd.s32 %s99, 1
      %s101 = scalar_select %p98, %s99, %s100
      %p104 = pneg %p98
      %p105 = scmp.eq.s32.totalorder %s25, 3
      %p106 = por %p104, %p105
      %p107 = scmp.ne.s32.totalorder %s99, %s102
      %p108 = scmp.eq.s32.totalorder %s25, 0
      %p109 = por %p107, %p108
      %p110 = scmp.ne.s32.totalorder %s99, %s102
      %p111 = scmp.eq.s32.totalorder %s30, 3
      %p112 = por %p110, %p111
      %p113 = scmp.ne.s32.totalorder %s102, %s103
      %p114 = scmp.eq.s32.totalorder %s30, 0
      %p115 = por %p113, %p114
      %p116 = scmp.ne.s32.totalorder %s102, %s103
      %p117 = scmp.eq.s32.totalorder %s31, 3
      %p118 = por %p116, %p117
      %p120 = scmp.ne.s32.totalorder %s103, %s119
      %p121 = scmp.eq.s32.totalorder %s31, 0
      %p122 = por %p120, %p121
      %s123 = ssub.s32 %s33, %s40
      %p124 = scmp.eq.s32.totalorder %s123, 0
      %s126 = sadd.s32 %s125, 1
      %s127 = scalar_select %p124, %s125, %s126
      %p130 = pneg %p124
      %p131 = scmp.eq.s32.totalorder %s25, 3
      %p132 = por %p130, %p131
      %p133 = scmp.ne.s32.totalorder %s125, %s128
      %p134 = scmp.eq.s32.totalorder %s25, 0
      %p135 = por %p133, %p134
      %p136 = scmp.ne.s32.totalorder %s125, %s128
      %p137 = scmp.eq.s32.totalorder %s30, 3
      %p138 = por %p136, %p137
      %p139 = scmp.ne.s32.totalorder %s128, %s129
      %p140 = scmp.eq.s32.totalorder %s30, 0
      %p141 = por %p139, %p140
      %p142 = scmp.ne.s32.totalorder %s128, %s129
      %p143 = scmp.eq.s32.totalorder %s31, 3
      %p144 = por %p142, %p143
      %p146 = scmp.ne.s32.totalorder %s129, %s145
      %p147 = scmp.eq.s32.totalorder %s31, 0
      %p148 = por %p146, %p147
      %s149 = ssub.s32 %s33, %s40
      %p150 = scmp.eq.s32.totalorder %s149, 0
      %s152 = sadd.s32 %s151, 1
      %s153 = scalar_select %p150, %s151, %s152
      %p156 = pneg %p150
      %p157 = scmp.eq.s32.totalorder %s25, 3
      %p158 = por %p156, %p157
      %p159 = scmp.ne.s32.totalorder %s151, %s154
      %p160 = scmp.eq.s32.totalorder %s25, 0
      %p161 = por %p159, %p160
      %p162 = scmp.ne.s32.totalorder %s151, %s154
      %p163 = scmp.eq.s32.totalorder %s30, 3
      %p164 = por %p162, %p163
      %p165 = scmp.ne.s32.totalorder %s154, %s155
      %p166 = scmp.eq.s32.totalorder %s30, 0
      %p167 = por %p165, %p166
      %p168 = scmp.ne.s32.totalorder %s154, %s155
      %p169 = scmp.eq.s32.totalorder %s31, 3
      %p170 = por %p168, %p169
      %p172 = scmp.ne.s32.totalorder %s155, %s171
      %p173 = scmp.eq.s32.totalorder %s31, 0
      %p174 = por %p172, %p173
      %s175 = ssub.s32 %s33, %s40
      %p176 = scmp.eq.s32.totalorder %s175, 0
      %s178 = sadd.s32 %s177, 1
      %s179 = scalar_select %p176, %s177, %s178
      %p182 = pneg %p176
      %p183 = scmp.eq.s32.totalorder %s25, 3
      %p184 = por %p182, %p183
      %p185 = scmp.ne.s32.totalorder %s177, %s180
      %p186 = scmp.eq.s32.totalorder %s25, 0
      %p187 = por %p185, %p186
      %p188 = scmp.ne.s32.totalorder %s177, %s180
      %p189 = scmp.eq.s32.totalorder %s30, 3
      %p190 = por %p188, %p189
      %p191 = scmp.ne.s32.totalorder %s180, %s181
      %p192 = scmp.eq.s32.totalorder %s30, 0
      %p193 = por %p191, %p192
      %p194 = scmp.ne.s32.totalorder %s180, %s181
      %p195 = scmp.eq.s32.totalorder %s31, 3
      %p196 = por %p194, %p195
      %p198 = scmp.ne.s32.totalorder %s181, %s197
      %p199 = scmp.eq.s32.totalorder %s31, 0
      %p200 = por %p198, %p199
      %s201 = ssub.s32 %s33, %s40
      %p202 = scmp.eq.s32.totalorder %s201, 0
      %s204 = sadd.s32 %s203, 1
      %s205 = scalar_select %p202, %s203, %s204
      %p208 = pneg %p202
      %p209 = scmp.eq.s32.totalorder %s25, 3
      %p210 = por %p208, %p209
      %p211 = scmp.ne.s32.totalorder %s203, %s206
      %p212 = scmp.eq.s32.totalorder %s25, 0
      %p213 = por %p211, %p212
      %p214 = scmp.ne.s32.totalorder %s203, %s206
      %p215 = scmp.eq.s32.totalorder %s30, 3
      %p216 = por %p214, %p215
      %p217 = scmp.ne.s32.totalorder %s206, %s207
      %p218 = scmp.eq.s32.totalorder %s30, 0
      %p219 = por %p217, %p218
      %p220 = scmp.ne.s32.totalorder %s206, %s207
      %p221 = scmp.eq.s32.totalorder %s31, 3
      %p222 = por %p220, %p221
      %p224 = scmp.ne.s32.totalorder %s207, %s223
      %p225 = scmp.eq.s32.totalorder %s31, 0
      %p226 = por %p224, %p225
      %s227 = ssub.s32 %s33, %s40
      %p228 = scmp.eq.s32.totalorder %s227, 0
      %s230 = sadd.s32 %s229, 1
      %s231 = scalar_select %p228, %s229, %s230
      %p234 = pneg %p228
      %p235 = scmp.eq.s32.totalorder %s25, 3
      %p236 = por %p234, %p235
      %p237 = scmp.ne.s32.totalorder %s229, %s232
      %p238 = scmp.eq.s32.totalorder %s25, 0
      %p239 = por %p237, %p238
      %p240 = scmp.ne.s32.totalorder %s229, %s232
      %p241 = scmp.eq.s32.totalorder %s30, 3
      %p242 = por %p240, %p241
      %p243 = scmp.ne.s32.totalorder %s232, %s233
      %p244 = scmp.eq.s32.totalorder %s30, 0
      %p245 = por %p243, %p244
      %p246 = scmp.ne.s32.totalorder %s232, %s233
      %p247 = scmp.eq.s32.totalorder %s31, 3
      %p248 = por %p246, %p247
      %p250 = scmp.ne.s32.totalorder %s233, %s249
      %p251 = scmp.eq.s32.totalorder %s31, 0
      %p252 = por %p250, %p251
      %s253 = ssub.s32 %s33, %s40
      %p254 = scmp.eq.s32.totalorder %s253, 0
      %s256 = sadd.s32 %s255, 1
      %s257 = scalar_select %p254, %s255, %s256
      %p260 = pneg %p254
      %p261 = scmp.eq.s32.totalorder %s25, 3
      %p262 = por %p260, %p261
      %p263 = scmp.ne.s32.totalorder %s255, %s258
      %p264 = scmp.eq.s32.totalorder %s25, 0
      %p265 = por %p263, %p264
      %p266 = scmp.ne.s32.totalorder %s255, %s258
      %p267 = scmp.eq.s32.totalorder %s30, 3
      %p268 = por %p266, %p267
      %p269 = scmp.ne.s32.totalorder %s258, %s259
      %p270 = scmp.eq.s32.totalorder %s30, 0
      %p271 = por %p269, %p270
      %p272 = scmp.ne.s32.totalorder %s258, %s259
      %p273 = scmp.eq.s32.totalorder %s31, 3
      %p274 = por %p272, %p273
      %p276 = scmp.ne.s32.totalorder %s259, %s275
      %p277 = scmp.eq.s32.totalorder %s31, 0
      %p278 = por %p276, %p277
      %s279 = ssub.s32 %s33, %s40
      %p280 = scmp.eq.s32.totalorder %s279, 0
      %s282 = sadd.s32 %s281, 1
      %s283 = scalar_select %p280, %s281, %s282
      %p286 = pneg %p280
      %p287 = scmp.eq.s32.totalorder %s25, 3
      %p288 = por %p286, %p287
      %p289 = scmp.ne.s32.totalorder %s281, %s284
      %p290 = scmp.eq.s32.totalorder %s25, 0
      %p291 = por %p289, %p290
      %p292 = scmp.ne.s32.totalorder %s281, %s284
      %p293 = scmp.eq.s32.totalorder %s30, 3
      %p294 = por %p292, %p293
      %p295 = scmp.ne.s32.totalorder %s284, %s285
      %p296 = scmp.eq.s32.totalorder %s30, 0
      %p297 = por %p295, %p296
      %p298 = scmp.ne.s32.totalorder %s284, %s285
      %p299 = scmp.eq.s32.totalorder %s31, 3
      %p300 = por %p298, %p299
      %p302 = scmp.ne.s32.totalorder %s285, %s301
      %p303 = scmp.eq.s32.totalorder %s31, 0
      %p304 = por %p302, %p303
      %s305 = ssub.s32 %s33, %s40
      %p306 = scmp.eq.s32.totalorder %s305, 0
      %s308 = sadd.s32 %s307, 1
      %s309 = scalar_select %p306, %s307, %s308
      %p312 = pneg %p306
      %p313 = scmp.eq.s32.totalorder %s25, 3
      %p314 = por %p312, %p313
      %p315 = scmp.ne.s32.totalorder %s307, %s310
      %p316 = scmp.eq.s32.totalorder %s25, 0
      %p317 = por %p315, %p316
      %p318 = scmp.ne.s32.totalorder %s307, %s310
      %p319 = scmp.eq.s32.totalorder %s30, 3
      %p320 = por %p318, %p319
      %p321 = scmp.ne.s32.totalorder %s310, %s311
      %p322 = scmp.eq.s32.totalorder %s30, 0
      %p323 = por %p321, %p322
      %p324 = scmp.ne.s32.totalorder %s310, %s311
      %p325 = scmp.eq.s32.totalorder %s31, 3
      %p326 = por %p324, %p325
      %p328 = scmp.ne.s32.totalorder %s311, %s327
      %p329 = scmp.eq.s32.totalorder %s31, 0
      %p330 = por %p328, %p329
      %s331 = ssub.s32 %s33, %s40
      %p332 = scmp.eq.s32.totalorder %s331, 0
      %s334 = sadd.s32 %s333, 1
      %s335 = scalar_select %p332, %s333, %s334
      %p338 = pneg %p332
      %p339 = scmp.eq.s32.totalorder %s25, 3
      %p340 = por %p338, %p339
      %p341 = scmp.ne.s32.totalorder %s333, %s336
      %p342 = scmp.eq.s32.totalorder %s25, 0
      %p343 = por %p341, %p342
      %p344 = scmp.ne.s32.totalorder %s333, %s336
      %p345 = scmp.eq.s32.totalorder %s30, 3
      %p346 = por %p344, %p345
      %p347 = scmp.ne.s32.totalorder %s336, %s337
      %p348 = scmp.eq.s32.totalorder %s30, 0
      %p349 = por %p347, %p348
      %p350 = scmp.ne.s32.totalorder %s336, %s337
      %p351 = scmp.eq.s32.totalorder %s31, 3
      %p352 = por %p350, %p351
      %p354 = scmp.ne.s32.totalorder %s337, %s353
      %p355 = scmp.eq.s32.totalorder %s31, 0
      %p356 = por %p354, %p355
      %s357 = ssub.s32 %s33, %s40
      %p358 = scmp.eq.s32.totalorder %s357, 0
      %s360 = sadd.s32 %s359, 1
      %s361 = scalar_select %p358, %s359, %s360
      %p364 = pneg %p358
      %p365 = scmp.eq.s32.totalorder %s25, 3
      %p366 = por %p364, %p365
      %p367 = scmp.ne.s32.totalorder %s359, %s362
      %p368 = scmp.eq.s32.totalorder %s25, 0
      %p369 = por %p367, %p368
      %p370 = scmp.ne.s32.totalorder %s359, %s362
      %p371 = scmp.eq.s32.totalorder %s30, 3
      %p372 = por %p370, %p371
      %p373 = scmp.ne.s32.totalorder %s362, %s363
      %p374 = scmp.eq.s32.totalorder %s30, 0
      %p375 = por %p373, %p374
      %p376 = scmp.ne.s32.totalorder %s362, %s363
      %p377 = scmp.eq.s32.totalorder %s31, 3
      %p378 = por %p376, %p377
      %p380 = scmp.ne.s32.totalorder %s363, %s379
      %p381 = scmp.eq.s32.totalorder %s31, 0
      %p382 = por %p380, %p381
      %s383 = ssub.s32 %s33, %s40
      %p384 = scmp.eq.s32.totalorder %s383, 0
      %s386 = sadd.s32 %s385, 1
      %s387 = scalar_select %p384, %s385, %s386
      %p390 = pneg %p384
      %p391 = scmp.eq.s32.totalorder %s25, 3
      %p392 = por %p390, %p391
      %p393 = scmp.ne.s32.totalorder %s385, %s388
      %p394 = scmp.eq.s32.totalorder %s25, 0
      %p395 = por %p393, %p394
      %p396 = scmp.ne.s32.totalorder %s385, %s388
      %p397 = scmp.eq.s32.totalorder %s30, 3
      %p398 = por %p396, %p397
      %p399 = scmp.ne.s32.totalorder %s388, %s389
      %p400 = scmp.eq.s32.totalorder %s30, 0
      %p401 = por %p399, %p400
      %p402 = scmp.ne.s32.totalorder %s388, %s389
      %p403 = scmp.eq.s32.totalorder %s31, 3
      %p404 = por %p402, %p403
      %p406 = scmp.ne.s32.totalorder %s389, %s405
      %p407 = scmp.eq.s32.totalorder %s31, 0
      %p408 = por %p406, %p407
      %s409 = ssub.s32 %s32, %s44
      %p410 = scmp.eq.s32.totalorder %s409, 0
      %s412 = sadd.s32 %s411, 1
      %s413 = scalar_select %p410, %s411, %s412
      %p416 = pneg %p410
      %p417 = scmp.eq.s32.totalorder %s25, 3
      %p418 = por %p416, %p417
      %p419 = scmp.ne.s32.totalorder %s411, %s414
      %p420 = scmp.eq.s32.totalorder %s25, 0
      %p421 = por %p419, %p420
      %p422 = scmp.ne.s32.totalorder %s411, %s414
      %p423 = scmp.eq.s32.totalorder %s30, 3
      %p424 = por %p422, %p423
      %p425 = scmp.ne.s32.totalorder %s414, %s415
      %p426 = scmp.eq.s32.totalorder %s30, 0
      %p427 = por %p425, %p426
      %p428 = scmp.ne.s32.totalorder %s414, %s415
      %p429 = scmp.eq.s32.totalorder %s31, 3
      %p430 = por %p428, %p429
      %p432 = scmp.ne.s32.totalorder %s415, %s431
      %p433 = scmp.eq.s32.totalorder %s31, 0
      %p434 = por %p432, %p433
      %s435 = ssub.s32 %s33, %s40
      %s436 = ssub.s32 %s32, %s44
      %s437 = sor.u32 %s435, %s436
      %p438 = scmp.eq.s32.totalorder %s437, 0
      %s440 = sadd.s32 %s439, 1
      %s441 = scalar_select %p438, %s439, %s440
      %p444 = pneg %p438
      %p445 = scmp.eq.s32.totalorder %s25, 3
      %p446 = por %p444, %p445
      %p447 = scmp.ne.s32.totalorder %s439, %s442
      %p448 = scmp.eq.s32.totalorder %s25, 0
      %p449 = por %p447, %p448
      %p450 = scmp.ne.s32.totalorder %s439, %s442
      %p451 = scmp.eq.s32.totalorder %s30, 3
      %p452 = por %p450, %p451
      %p453 = scmp.ne.s32.totalorder %s442, %s443
      %p454 = scmp.eq.s32.totalorder %s30, 0
      %p455 = por %p453, %p454
      %p456 = scmp.ne.s32.totalorder %s442, %s443
      %p457 = scmp.eq.s32.totalorder %s31, 3
      %p458 = por %p456, %p457
      %p460 = scmp.ne.s32.totalorder %s443, %s459
      %p461 = scmp.eq.s32.totalorder %s31, 0
      %p462 = por %p460, %p461
      %p463 = scmp.le.s32.totalorder 1, %s25
      %p464 = scmp.lt.s32.totalorder %s25, 5
      %p465 = pnand %p463, %p464
      %p466 = pneg %p465
      // Predicated region
      $region9: #{transformer_encoder.1} parent=5 // pred_check
        _
      $region10: #{transformer_encoder.1} parent=5 // pred_check_branch
        %468 = sbr.rel (%p465) target = $region12
      $region11: #{transformer_encoder.1} parent=5 // pred_region
        %s469 = ssub.s32 %s25, 1
      $region12: #{transformer_encoder.1} parent=5 // pred_fallthru
        _
      %p470 = scmp.lt.s32.totalorder %s25, 4
      // Predicated region
      $region13: #{transformer_encoder.1} parent=5 // pred_check
        %p471 = pneg %p470
      $region14: #{transformer_encoder.1} parent=5 // pred_check_branch
        %473 = sbr.rel (%p471) target = $region16
      $region15: #{transformer_encoder.1} parent=5 // pred_region
        // Predicated region
        $region17: #{transformer_encoder.1} parent=15 // pred_check
          %p474 = pneg %p57
        $region18: #{transformer_encoder.1} parent=15 // pred_check_branch
          %476 = sbr.rel (%p474) target = $region20
        $region19: #{transformer_encoder.1} parent=15 // pred_region
          %p477 = scmp.lt.s32.totalorder %s32, 1
          %s478 = scalar_select %p477, %s32, 1
          %s479 = smul.addr %s478, 8
          %s480 = scalar_lea.vmem %s0, %s479
        $region20: #{transformer_encoder.1} parent=15 // pred_fallthru
          _
        // Predicated region
        $region21: #{transformer_encoder.1} parent=15 // pred_check
          %p481 = pneg %p83
        $region22: #{transformer_encoder.1} parent=15 // pred_check_branch
          %483 = sbr.rel (%p481) target = $region24
        $region23: #{transformer_encoder.1} parent=15 // pred_region
          %p484 = scmp.lt.s32.totalorder %s32, 1
          %s485 = scalar_select %p484, %s32, 1
          %s486 = scalar_lea.vmem %s1, %s485
        $region24: #{transformer_encoder.1} parent=15 // pred_fallthru
          _
        // Predicated region
        $region25: #{transformer_encoder.1} parent=15 // pred_check
          %p487 = pneg %p109
        $region26: #{transformer_encoder.1} parent=15 // pred_check_branch
          %489 = sbr.rel (%p487) target = $region28
        $region27: #{transformer_encoder.1} parent=15 // pred_region
          %p490 = scmp.lt.s32.totalorder %s33, 1
          %s491 = scalar_select %p490, %s33, 1
          %s492 = smul.addr %s491, 4
          %s493 = smul.addr %s492, 4
          %s494 = scalar_lea.vmem %s2, %s493
        $region28: #{transformer_encoder.1} parent=15 // pred_fallthru
          _
        // Predicated region
        $region29: #{transformer_encoder.1} parent=15 // pred_check
          %p495 = pneg %p135
        $region30: #{transformer_encoder.1} parent=15 // pred_check_branch
          %497 = sbr.rel (%p495) target = $region32
        $region31: #{transformer_encoder.1} parent=15 // pred_region
          %p498 = scmp.lt.s32.totalorder %s33, 1
          %s499 = scalar_select %p498, %s33, 1
          %s500 = scalar_lea.vmem %s3, %s499
        $region32: #{transformer_encoder.1} parent=15 // pred_fallthru
          _
        // Predicated region
        $region33: #{transformer_encoder.1} parent=15 // pred_check
          %p501 = pneg %p161
        $region34: #{transformer_encoder.1} parent=15 // pred_check_branch
          %503 = sbr.rel (%p501) target = $region36
        $region35: #{transformer_encoder.1} parent=15 // pred_region
          %p504 = scmp.lt.s32.totalorder %s33, 1
          %s505 = scalar_select %p504, %s33, 1
          %s506 = smul.addr %s505, 4
          %s507 = smul.addr %s506, 4
          %s508 = scalar_lea.vmem %s4, %s507
        $region36: #{transformer_encoder.1} parent=15 // pred_fallthru
          _
        // Predicated region
        $region37: #{transformer_encoder.1} parent=15 // pred_check
          %p509 = pneg %p187
        $region38: #{transformer_encoder.1} parent=15 // pred_check_branch
          %511 = sbr.rel (%p509) target = $region40
        $region39: #{transformer_encoder.1} parent=15 // pred_region
          %p512 = scmp.lt.s32.totalorder %s33, 1
          %s513 = scalar_select %p512, %s33, 1
          %s514 = scalar_lea.vmem %s5, %s513
        $region40: #{transformer_encoder.1} parent=15 // pred_fallthru
          _
        // Predicated region
        $region41: #{transformer_encoder.1} parent=15 // pred_check
          %p515 = pneg %p213
        $region42: #{transformer_encoder.1} parent=15 // pred_check_branch
          %517 = sbr.rel (%p515) target = $region44
        $region43: #{transformer_encoder.1} parent=15 // pred_region
          %p518 = scmp.lt.s32.totalorder %s33, 1
          %s519 = scalar_select %p518, %s33, 1
          %s520 = scalar_lea.vmem %s6, %s519
        $region44: #{transformer_encoder.1} parent=15 // pred_fallthru
          _
        // Predicated region
        $region45: #{transformer_encoder.1} parent=15 // pred_check
          %p521 = pneg %p239
        $region46: #{transformer_encoder.1} parent=15 // pred_check_branch
          %523 = sbr.rel (%p521) target = $region48
        $region47: #{transformer_encoder.1} parent=15 // pred_region
          %p524 = scmp.lt.s32.totalorder %s33, 1
          %s525 = scalar_select %p524, %s33, 1
          %s526 = scalar_lea.vmem %s7, %s525
        $region48: #{transformer_encoder.1} parent=15 // pred_fallthru
          _
        // Predicated region
        $region49: #{transformer_encoder.1} parent=15 // pred_check
          %p527 = pneg %p265
        $region50: #{transformer_encoder.1} parent=15 // pred_check_branch
          %529 = sbr.rel (%p527) target = $region52
        $region51: #{transformer_encoder.1} parent=15 // pred_region
          %p530 = scmp.lt.s32.totalorder %s33, 1
          %s531 = scalar_select %p530, %s33, 1
          %s532 = smul.addr %s531, 4
          %s533 = smul.addr %s532, 4
          %s534 = scalar_lea.vmem %s8, %s533
        $region52: #{transformer_encoder.1} parent=15 // pred_fallthru
          _
        // Predicated region
        $region53: #{transformer_encoder.1} parent=15 // pred_check
          %p535 = pneg %p291
        $region54: #{transformer_encoder.1} parent=15 // pred_check_branch
          %537 = sbr.rel (%p535) target = $region56
        $region55: #{transformer_encoder.1} parent=15 // pred_region
          %p538 = scmp.lt.s32.totalorder %s33, 1
          %s539 = scalar_select %p538, %s33, 1
          %s540 = scalar_lea.vmem %s9, %s539
        $region56: #{transformer_encoder.1} parent=15 // pred_fallthru
          _
        // Predicated region
        $region57: #{transformer_encoder.1} parent=15 // pred_check
          %p541 = pneg %p317
        $region58: #{transformer_encoder.1} parent=15 // pred_check_branch
          %543 = sbr.rel (%p541) target = $region60
        $region59: #{transformer_encoder.1} parent=15 // pred_region
          %p544 = scmp.lt.s32.totalorder %s33, 1
          %s545 = scalar_select %p544, %s33, 1
          %s546 = smul.addr %s545, 8
          %s547 = smul.addr %s546, 4
          %s548 = scalar_lea.vmem %s10, %s547
        $region60: #{transformer_encoder.1} parent=15 // pred_fallthru
          _
        // Predicated region
        $region61: #{transformer_encoder.1} parent=15 // pred_check
          %p549 = pneg %p343
        $region62: #{transformer_encoder.1} parent=15 // pred_check_branch
          %551 = sbr.rel (%p549) target = $region64
        $region63: #{transformer_encoder.1} parent=15 // pred_region
          %p552 = scmp.lt.s32.totalorder %s33, 1
          %s553 = scalar_select %p552, %s33, 1
          %s554 = scalar_lea.vmem %s11, %s553
        $region64: #{transformer_encoder.1} parent=15 // pred_fallthru
          _
        // Predicated region
        $region65: #{transformer_encoder.1} parent=15 // pred_check
          %p555 = pneg %p369
        $region66: #{transformer_encoder.1} parent=15 // pred_check_branch
          %557 = sbr.rel (%p555) target = $region68
        $region67: #{transformer_encoder.1} parent=15 // pred_region
          %p558 = scmp.lt.s32.totalorder %s33, 1
          %s559 = scalar_select %p558, %s33, 1
          %s560 = scalar_lea.vmem %s12, %s559
        $region68: #{transformer_encoder.1} parent=15 // pred_fallthru
          _
        // Predicated region
        $region69: #{transformer_encoder.1} parent=15 // pred_check
          %p561 = pneg %p395
        $region70: #{transformer_encoder.1} parent=15 // pred_check_branch
          %563 = sbr.rel (%p561) target = $region72
        $region71: #{transformer_encoder.1} parent=15 // pred_region
          %p564 = scmp.lt.s32.totalorder %s33, 1
          %s565 = scalar_select %p564, %s33, 1
          %s566 = scalar_lea.vmem %s13, %s565
        $region72: #{transformer_encoder.1} parent=15 // pred_fallthru
          _
      $region16: #{transformer_encoder.1} parent=5 // pred_fallthru
        _
      %p567 = scmp.le.s32.totalorder 1, %s25
      %p568 = scmp.lt.s32.totalorder %s25, 5
      %p569 = pnand %p567, %p568
      %p570 = pneg %p569
      // Predicated region
      $region73: #{transformer_encoder.1} parent=5 // pred_check
        _
      $region74: #{transformer_encoder.1} parent=5 // pred_check_branch
        %572 = sbr.rel (%p569) target = $region76
      $region75: #{transformer_encoder.1} parent=5 // pred_region
        %s573 = ssub.s32 %s25, 1
        %p574 = scmp.lt.s32.totalorder %s34, 1
        %s575 = scalar_select %p574, %s34, 1
        %s576 = smul.addr %s575, 8
        %s577 = scalar_lea.vmem %s0, %s576
        %p578 = pneg %p63
        %p579 = pneg %p60
        %p580 = scmp.lt.s32.totalorder %s34, 1
        %s581 = scalar_select %p580, %s34, 1
        %s582 = scalar_lea.vmem %s1, %s581
        %p583 = pneg %p89
        %p584 = pneg %p86
        %p585 = scmp.lt.s32.totalorder %s35, 1
        %s586 = scalar_select %p585, %s35, 1
        %s587 = smul.addr %s586, 4
        %s588 = smul.addr %s587, 4
        %s589 = scalar_lea.vmem %s2, %s588
        %p590 = pneg %p115
        %p591 = pneg %p112
        %p592 = scmp.lt.s32.totalorder %s35, 1
        %s593 = scalar_select %p592, %s35, 1
        %s594 = scalar_lea.vmem %s3, %s593
        %p595 = pneg %p141
        %p596 = pneg %p138
        %p597 = scmp.lt.s32.totalorder %s35, 1
        %s598 = scalar_select %p597, %s35, 1
        %s599 = smul.addr %s598, 4
        %s600 = smul.addr %s599, 4
        %s601 = scalar_lea.vmem %s4, %s600
        %p602 = pneg %p167
        %p603 = pneg %p164
        %p604 = scmp.lt.s32.totalorder %s35, 1
        %s605 = scalar_select %p604, %s35, 1
        %s606 = scalar_lea.vmem %s5, %s605
        %p607 = pneg %p193
        %p608 = pneg %p190
        %p609 = scmp.lt.s32.totalorder %s35, 1
        %s610 = scalar_select %p609, %s35, 1
        %s611 = scalar_lea.vmem %s6, %s610
        %p612 = pneg %p219
        %p613 = pneg %p216
        %p614 = scmp.lt.s32.totalorder %s35, 1
        %s615 = scalar_select %p614, %s35, 1
        %s616 = scalar_lea.vmem %s7, %s615
        %p617 = pneg %p245
        %p618 = pneg %p242
        %p619 = scmp.lt.s32.totalorder %s35, 1
        %s620 = scalar_select %p619, %s35, 1
        %s621 = smul.addr %s620, 4
        %s622 = smul.addr %s621, 4
        %s623 = scalar_lea.vmem %s8, %s622
        %p624 = pneg %p271
        %p625 = pneg %p268
        %p626 = scmp.lt.s32.totalorder %s35, 1
        %s627 = scalar_select %p626, %s35, 1
        %s628 = scalar_lea.vmem %s9, %s627
        %p629 = pneg %p297
        %p630 = pneg %p294
        %p631 = scmp.lt.s32.totalorder %s35, 1
        %s632 = scalar_select %p631, %s35, 1
        %s633 = smul.addr %s632, 8
        %s634 = smul.addr %s633, 4
        %s635 = scalar_lea.vmem %s10, %s634
        %p636 = pneg %p323
        %p637 = pneg %p320
        %p638 = scmp.lt.s32.totalorder %s35, 1
        %s639 = scalar_select %p638, %s35, 1
        %s640 = scalar_lea.vmem %s11, %s639
        %p641 = pneg %p349
        %p642 = pneg %p346
        %p643 = scmp.lt.s32.totalorder %s35, 1
        %s644 = scalar_select %p643, %s35, 1
        %s645 = scalar_lea.vmem %s12, %s644
        %p646 = pneg %p375
        %p647 = pneg %p372
        %p648 = scmp.lt.s32.totalorder %s35, 1
        %s649 = scalar_select %p648, %s35, 1
        %s650 = scalar_lea.vmem %s13, %s649
        %p651 = pneg %p401
        %p652 = pneg %p398
        %p653 = pneg %p427
        %p654 = pneg %p424
        %p655 = scmp.lt.s32.totalorder %s34, 1
        %s656 = scalar_select %p655, %s34, 1
        %s657 = smul.addr %s656, 8
        %s658 = scalar_lea.vmem %s14, %s657
        %p659 = pneg %p455
        %p660 = pneg %p452
        %s661 = sand.u32 %s442, 1
        %s662 = scalar_lea.sflag [#allocation4], %s661
        %s663 = sand.u32 %s442, 1
        %s664 = smul.addr %s663, 8
        %s665 = scalar_lea.vmem [#allocation3], %s664
        %p666 = scmp.lt.s32.totalorder %s34, 1
        %s667 = scalar_select %p666, %s34, 1
        %s668 = smul.addr %s667, 8
        %s669 = scalar_lea.vmem %s0, %s668
        %p670 = scmp.lt.s32.totalorder %s34, 1
        %s671 = scalar_select %p670, %s34, 1
        %s672 = scalar_lea.vmem %s1, %s671
        %p673 = scmp.lt.s32.totalorder %s35, 1
        %s674 = scalar_select %p673, %s35, 1
        %s675 = smul.addr %s674, 4
        %s676 = smul.addr %s675, 4
        %s677 = scalar_lea.vmem %s2, %s676
        %p678 = scmp.lt.s32.totalorder %s35, 1
        %s679 = scalar_select %p678, %s35, 1
        %s680 = scalar_lea.vmem %s3, %s679
        %p681 = scmp.lt.s32.totalorder %s35, 1
        %s682 = scalar_select %p681, %s35, 1
        %s683 = smul.addr %s682, 4
        %s684 = smul.addr %s683, 4
        %s685 = scalar_lea.vmem %s4, %s684
        %p686 = scmp.lt.s32.totalorder %s35, 1
        %s687 = scalar_select %p686, %s35, 1
        %s688 = scalar_lea.vmem %s5, %s687
        %p689 = scmp.lt.s32.totalorder %s35, 1
        %s690 = scalar_select %p689, %s35, 1
        %s691 = scalar_lea.vmem %s6, %s690
        %p692 = scmp.lt.s32.totalorder %s35, 1
        %s693 = scalar_select %p692, %s35, 1
        %s694 = scalar_lea.vmem %s7, %s693
        %p695 = scmp.lt.s32.totalorder %s35, 1
        %s696 = scalar_select %p695, %s35, 1
        %s697 = smul.addr %s696, 4
        %s698 = smul.addr %s697, 4
        %s699 = scalar_lea.vmem %s8, %s698
        %p700 = scmp.lt.s32.totalorder %s35, 1
        %s701 = scalar_select %p700, %s35, 1
        %s702 = scalar_lea.vmem %s9, %s701
        %p703 = scmp.lt.s32.totalorder %s35, 1
        %s704 = scalar_select %p703, %s35, 1
        %s705 = smul.addr %s704, 8
        %s706 = smul.addr %s705, 4
        %s707 = scalar_lea.vmem %s10, %s706
        %p708 = scmp.lt.s32.totalorder %s35, 1
        %s709 = scalar_select %p708, %s35, 1
        %s710 = scalar_lea.vmem %s11, %s709
        %p711 = scmp.lt.s32.totalorder %s35, 1
        %s712 = scalar_select %p711, %s35, 1
        %s713 = scalar_lea.vmem %s12, %s712
        %p714 = scmp.lt.s32.totalorder %s35, 1
        %s715 = scalar_select %p714, %s35, 1
        %s716 = scalar_lea.vmem %s13, %s715
        %p717 = scmp.lt.s32.totalorder %s34, 1
        %s718 = scalar_select %p717, %s34, 1
        %s719 = smul.addr %s718, 8
        %s720 = scalar_lea.vmem %s14, %s719
        %p722 = scmp.eq.s32.totalorder %s35, 0
        // Predicated region
        $region77: #{transformer_encoder.1} parent=75 // pred_check
          %p723 = pneg %p722
        $region78: #{transformer_encoder.1} parent=75 // pred_check_branch
          %725 = sbr.rel (%p723) target = $region80
        $region79: #{transformer_encoder.1} parent=75 // pred_region
          %v726 = vld [vmem:[%s669] sm:$0xff]
          %vm727 = vcmask 261120
          %728 = vst.msk [vmem:[%s720] sm:$0xff] %vm727, %v726
        $region80: #{transformer_encoder.1} parent=75 // pred_fallthru
          _
        %v729 = vld [vmem:[%s720] sm:$0xff]
        %v730 = vpack.c.bf16 %v729, %v729
        %v731 = vld [vmem:[%s677] sm:$0xf]
        %v732 = vld [vmem:[%s677 + $0x4] sm:$0xf]
        %v733 = vld [vmem:[%s677 + $0x8] sm:$0xf]
        %v734 = vld [vmem:[%s677 + $0xc] sm:$0xf]
        %v735 = vld [vmem:[%s680] sm:$0x1]
        %v737 = vlaneseq
        %v738 = vshrl.u32 %v737, 7
        %v739 = vsub.s32 0, %v738
        %v740 = vrot.slane %v735, %v739
        %v746 = vunpack.c.l.b16 %v731
        %v747 = vunpack.c.l.b16 %v732
        %v748 = vunpack.c.l.b16 %v733
        %v749 = vunpack.c.l.b16 %v734
        %v750 = vpack.c.b16 %v747, %v746
        %v751 = vpack.c.b16 %v749, %v748
        %vm754 = vcmask 261120
        %v756 = vsel %vm754, %v730, 0
        %758 = vmatprep.subr.bf16.mxu0 0
        %759 = vmatpush1.bf16.msra.mxu0 %v750
        %760 = vmatprep.subr.bf16.mxu0 0
        %761 = vmatpush1.bf16.msra.mxu0 %v751
        %762 = vmatprep.subr.bf16.mxu0 0
        %763 = vmatpush1.bf16.msra.mxu0 0
        %764 = vmatprep.subr.bf16.mxu0 0
        %765 = vmatpush1.bf16.msra.mxu0 0
        %766 = vmatprep.subr.bf16.mxu0 0
        %767 = vmatpush1.bf16.msra.mxu0 0
        %768 = vmatprep.subr.bf16.mxu0 0
        %769 = vmatpush1.bf16.msra.mxu0 0
        %770 = vmatprep.subr.bf16.mxu0 0
        %771 = vmatpush1.bf16.msra.mxu0 0
        %772 = vmatprep.subr.bf16.mxu0 0
        %773 = vmatpush1.bf16.msra.mxu0 0
        %774 = vmatprep.subr.bf16.mxu0 0
        %775 = vmatpush1.bf16.msra.mxu0 0
        %776 = vmatprep.subr.bf16.mxu0 0
        %777 = vmatpush1.bf16.msra.mxu0 0
        %778 = vmatprep.subr.bf16.mxu0 0
        %779 = vmatpush1.bf16.msra.mxu0 0
        %780 = vmatprep.subr.bf16.mxu0 0
        %781 = vmatpush1.bf16.msra.mxu0 0
        %782 = vmatprep.subr.bf16.mxu0 0
        %783 = vmatpush1.bf16.msra.mxu0 0
        %784 = vmatprep.subr.bf16.mxu0 0
        %785 = vmatpush1.bf16.msra.mxu0 0
        %786 = vmatprep.subr.bf16.mxu0 0
        %787 = vmatpush1.bf16.msra.mxu0 0
        %788 = vmatprep.subr.bf16.mxu0 0
        %789 = vmatpush1.bf16.msra.mxu0 0
        %790 = vmatprep.mubr.bf16.mxu0 0
        %791 = vmatmul.mubr.bf16.gmra.mrb[0].mxu0 %v756
        %v792 = vpop.f32.mrb[0].mxu0
        %v793 = vadd.f32 %v740, %v792
        %v794 = vpop.f32.mrb[0].mxu0
        %v795 = vpop.f32.mrb[0].mxu0
        %v796 = vpop.f32.mrb[0].mxu0
        %797 = vdwg.mxu0
        %v798 = vpack.c.bf16 %v793, %v793
        %v799 = vld [vmem:[%s672] sm:$0x1]
        %v801 = vlaneseq
        %v802 = vshrl.u32 %v801, 7
        %v803 = vsub.s32 0, %v802
        %v804 = vrot.slane %v799, %v803
        %807 = vrot.lane.b32.xlu0 %v798, 96
        %v808 = vpop.permute.xlu0 %807
        %vm809 = vcmask 64512
        %v811 = vsel %vm809, %v798, 0
        %v814 = vsel %vm809, %v808, 0
        %816 = vmatprep.subr.bf16.mxu0 0
        %817 = vmatpush1.bf16.xpose.msra.mxu0 %v814
        %818 = vmatprep.subr.bf16.mxu0 0
        %819 = vmatpush1.bf16.xpose.msra.mxu0 0
        %820 = vmatprep.subr.bf16.mxu0 0
        %821 = vmatpush1.bf16.xpose.msra.mxu0 0
        %822 = vmatprep.subr.bf16.mxu0 0
        %823 = vmatpush1.bf16.xpose.msra.mxu0 0
        %824 = vmatprep.subr.bf16.mxu0 0
        %825 = vmatpush1.bf16.xpose.msra.mxu0 0
        %826 = vmatprep.subr.bf16.mxu0 0
        %827 = vmatpush1.bf16.xpose.msra.mxu0 0
        %828 = vmatprep.subr.bf16.mxu0 0
        %829 = vmatpush1.bf16.xpose.msra.mxu0 0
        %830 = vmatprep.subr.bf16.mxu0 0
        %831 = vmatpush1.bf16.xpose.msra.mxu0 0
        %832 = vmatprep.subr.bf16.mxu0 0
        %833 = vmatpush1.bf16.xpose.msra.mxu0 0
        %834 = vmatprep.subr.bf16.mxu0 0
        %835 = vmatpush1.bf16.xpose.msra.mxu0 0
        %836 = vmatprep.subr.bf16.mxu0 0
        %837 = vmatpush1.bf16.xpose.msra.mxu0 0
        %838 = vmatprep.subr.bf16.mxu0 0
        %839 = vmatpush1.bf16.xpose.msra.mxu0 0
        %840 = vmatprep.subr.bf16.mxu0 0
        %841 = vmatpush1.bf16.xpose.msra.mxu0 0
        %842 = vmatprep.subr.bf16.mxu0 0
        %843 = vmatpush1.bf16.xpose.msra.mxu0 0
        %844 = vmatprep.subr.bf16.mxu0 0
        %845 = vmatpush1.bf16.xpose.msra.mxu0 0
        %846 = vmatprep.subr.bf16.mxu0 0
        %847 = vmatpush1.bf16.xpose.msra.mxu0 0
        %848 = vmatprep.mubr.bf16.mxu0 0
        %849 = vmatmul.mubr.bf16.gmra.mrb[0].mxu0 %v811
        %v850 = vpop.f32.mrb[0].mxu0
        %v851 = vadd.f32 %v804, %v850
        %v852 = vpop.f32.mrb[0].mxu0
        %v853 = vpop.f32.mrb[0].mxu0
        %v854 = vpop.f32.mrb[0].mxu0
        %855 = vdwg.mxu0
        %v856 = vsel %vm809, %v851, -inf
        %857 = vmax.xlane.f32.xlu0 %v856
        %v858 = vpop.xlane.xlu0 %857
        %v859 = vsub.f32 %v851, %v858
        %v860 = vmul.f32 %v859, 1.442695
        %v861 = vpow.pop %v860
        %v862 = vsel %vm809, %v861, 0.0
        %863 = vadd.xlane.f32.xlu0 %v862
        %v864 = vpop.xlane.xlu0 %863
        %v865 = vrcp.pop %v864
        %v866 = vmul.f32 1.0, %v865
        %v867 = vmul.f32 %v861, %v866
        %v868 = vadd.f32 %v867, 0.0
        %v869 = vpack.c.bf16 %v867, %v867
        %870 = vrot.lane.b32.xlu0 %v798, 64
        %v871 = vpop.permute.xlu0 %870
        %v873 = vsel %vm809, %v869, 0
        %vm875 = vcmask 1043456
        %v877 = vsel %vm875, %v871, 0
        %879 = vmatprep.subr.bf16.mxu0 0
        %880 = vmatpush1.bf16.msra.mxu0 %v877
        %881 = vmatprep.subr.bf16.mxu0 0
        %882 = vmatpush1.bf16.msra.mxu0 0
        %883 = vmatprep.subr.bf16.mxu0 0
        %884 = vmatpush1.bf16.msra.mxu0 0
        %885 = vmatprep.subr.bf16.mxu0 0
        %886 = vmatpush1.bf16.msra.mxu0 0
        %887 = vmatprep.subr.bf16.mxu0 0
        %888 = vmatpush1.bf16.msra.mxu0 0
        %889 = vmatprep.subr.bf16.mxu0 0
        %890 = vmatpush1.bf16.msra.mxu0 0
        %891 = vmatprep.subr.bf16.mxu0 0
        %892 = vmatpush1.bf16.msra.mxu0 0
        %893 = vmatprep.subr.bf16.mxu0 0
        %894 = vmatpush1.bf16.msra.mxu0 0
        %895 = vmatprep.subr.bf16.mxu0 0
        %896 = vmatpush1.bf16.msra.mxu0 0
        %897 = vmatprep.subr.bf16.mxu0 0
        %898 = vmatpush1.bf16.msra.mxu0 0
        %899 = vmatprep.subr.bf16.mxu0 0
        %900 = vmatpush1.bf16.msra.mxu0 0
        %901 = vmatprep.subr.bf16.mxu0 0
        %902 = vmatpush1.bf16.msra.mxu0 0
        %903 = vmatprep.subr.bf16.mxu0 0
        %904 = vmatpush1.bf16.msra.mxu0 0
        %905 = vmatprep.subr.bf16.mxu0 0
        %906 = vmatpush1.bf16.msra.mxu0 0
        %907 = vmatprep.subr.bf16.mxu0 0
        %908 = vmatpush1.bf16.msra.mxu0 0
        %909 = vmatprep.subr.bf16.mxu0 0
        %910 = vmatpush1.bf16.msra.mxu0 0
        %911 = vmatprep.mubr.bf16.mxu0 0
        %912 = vmatmul.mubr.bf16.gmra.mrb[0].mxu0 %v873
        %v913 = vpop.f32.mrb[0].mxu0
        %v914 = vadd.f32 0.0, %v913
        %v915 = vpop.f32.mrb[0].mxu0
        %v916 = vpop.f32.mrb[0].mxu0
        %v917 = vpop.f32.mrb[0].mxu0
        %918 = vdwg.mxu0
        %919 = vst.msk [vmem:[#allocation2] sm:$0xff] %vm809, %v914
        %920 = vrot.lane.b32.xlu0 %v798, 120
        %v921 = vpop.permute.xlu0 %920
        %922 = vrot.lane.b32.xlu0 %v798, 88
        %v923 = vpop.permute.xlu0 %922
        %v925 = vsel %vm809, %v921, 0
        %v928 = vsel %vm809, %v923, 0
        %930 = vmatprep.subr.bf16.mxu0 0
        %931 = vmatpush1.bf16.xpose.msra.mxu0 %v928
        %932 = vmatprep.subr.bf16.mxu0 0
        %933 = vmatpush1.bf16.xpose.msra.mxu0 0
        %934 = vmatprep.subr.bf16.mxu0 0
        %935 = vmatpush1.bf16.xpose.msra.mxu0 0
        %936 = vmatprep.subr.bf16.mxu0 0
        %937 = vmatpush1.bf16.xpose.msra.mxu0 0
        %938 = vmatprep.subr.bf16.mxu0 0
        %939 = vmatpush1.bf16.xpose.msra.mxu0 0
        %940 = vmatprep.subr.bf16.mxu0 0
        %941 = vmatpush1.bf16.xpose.msra.mxu0 0
        %942 = vmatprep.subr.bf16.mxu0 0
        %943 = vmatpush1.bf16.xpose.msra.mxu0 0
        %944 = vmatprep.subr.bf16.mxu0 0
        %945 = vmatpush1.bf16.xpose.msra.mxu0 0
        %946 = vmatprep.subr.bf16.mxu0 0
        %947 = vmatpush1.bf16.xpose.msra.mxu0 0
        %948 = vmatprep.subr.bf16.mxu0 0
        %949 = vmatpush1.bf16.xpose.msra.mxu0 0
        %950 = vmatprep.subr.bf16.mxu0 0
        %951 = vmatpush1.bf16.xpose.msra.mxu0 0
        %952 = vmatprep.subr.bf16.mxu0 0
        %953 = vmatpush1.bf16.xpose.msra.mxu0 0
        %954 = vmatprep.subr.bf16.mxu0 0
        %955 = vmatpush1.bf16.xpose.msra.mxu0 0
        %956 = vmatprep.subr.bf16.mxu0 0
        %957 = vmatpush1.bf16.xpose.msra.mxu0 0
        %958 = vmatprep.subr.bf16.mxu0 0
        %959 = vmatpush1.bf16.xpose.msra.mxu0 0
        %960 = vmatprep.subr.bf16.mxu0 0
        %961 = vmatpush1.bf16.xpose.msra.mxu0 0
        %962 = vmatprep.mubr.bf16.mxu0 0
        %963 = vmatmul.mubr.bf16.gmra.mrb[0].mxu0 %v925
        %v964 = vpop.f32.mrb[0].mxu0
        %v965 = vadd.f32 %v804, %v964
        %v966 = vpop.f32.mrb[0].mxu0
        %v967 = vpop.f32.mrb[0].mxu0
        %v968 = vpop.f32.mrb[0].mxu0
        %969 = vdwg.mxu0
        %v970 = vsel %vm809, %v965, -inf
        %971 = vmax.xlane.f32.xlu0 %v970
        %v972 = vpop.xlane.xlu0 %971
        %v973 = vsub.f32 %v965, %v972
        %v974 = vmul.f32 %v973, 1.442695
        %v975 = vpow.pop %v974
        %v976 = vsel %vm809, %v975, 0.0
        %977 = vadd.xlane.f32.xlu0 %v976
        %v978 = vpop.xlane.xlu0 %977
        %v979 = vrcp.pop %v978
        %v980 = vmul.f32 1.0, %v979
        %v981 = vmul.f32 %v975, %v980
        %v982 = vadd.f32 %v868, %v981
        %v983 = vpack.c.bf16 %v981, %v981
        %984 = vrot.lane.b32.xlu0 %v798, 56
        %v985 = vpop.permute.xlu0 %984
        %v987 = vsel %vm809, %v983, 0
        %v990 = vsel %vm875, %v985, 0
        %992 = vmatprep.subr.bf16.mxu0 0
        %993 = vmatpush1.bf16.msra.mxu0 %v990
        %994 = vmatprep.subr.bf16.mxu0 0
        %995 = vmatpush1.bf16.msra.mxu0 0
        %996 = vmatprep.subr.bf16.mxu0 0
        %997 = vmatpush1.bf16.msra.mxu0 0
        %998 = vmatprep.subr.bf16.mxu0 0
        %999 = vmatpush1.bf16.msra.mxu0 0
        %1000 = vmatprep.subr.bf16.mxu0 0
        %1001 = vmatpush1.bf16.msra.mxu0 0
        %1002 = vmatprep.subr.bf16.mxu0 0
        %1003 = vmatpush1.bf16.msra.mxu0 0
        %1004 = vmatprep.subr.bf16.mxu0 0
        %1005 = vmatpush1.bf16.msra.mxu0 0
        %1006 = vmatprep.subr.bf16.mxu0 0
        %1007 = vmatpush1.bf16.msra.mxu0 0
        %1008 = vmatprep.subr.bf16.mxu0 0
        %1009 = vmatpush1.bf16.msra.mxu0 0
        %1010 = vmatprep.subr.bf16.mxu0 0
        %1011 = vmatpush1.bf16.msra.mxu0 0
        %1012 = vmatprep.subr.bf16.mxu0 0
        %1013 = vmatpush1.bf16.msra.mxu0 0
        %1014 = vmatprep.subr.bf16.mxu0 0
        %1015 = vmatpush1.bf16.msra.mxu0 0
        %1016 = vmatprep.subr.bf16.mxu0 0
        %1017 = vmatpush1.bf16.msra.mxu0 0
        %1018 = vmatprep.subr.bf16.mxu0 0
        %1019 = vmatpush1.bf16.msra.mxu0 0
        %1020 = vmatprep.subr.bf16.mxu0 0
        %1021 = vmatpush1.bf16.msra.mxu0 0
        %1022 = vmatprep.subr.bf16.mxu0 0
        %1023 = vmatpush1.bf16.msra.mxu0 0
        %1024 = vmatprep.mubr.bf16.mxu0 0
        %1025 = vmatmul.mubr.bf16.gmra.mrb[0].mxu0 %v987
        %v1026 = vpop.f32.mrb[0].mxu0
        %v1027 = vadd.f32 0.0, %v1026
        %v1028 = vpop.f32.mrb[0].mxu0
        %v1029 = vpop.f32.mrb[0].mxu0
        %v1030 = vpop.f32.mrb[0].mxu0
        %1031 = vdwg.mxu0
        %1033 = vrot.lane.b32.xlu0 %v1027, 8
        %v1034 = vpop.permute.xlu0 %1033
        %vm1036 = vcmask 130112
        %1037 = vst.msk [vmem:[#allocation2] sm:$0xff] %vm1036, %v1034
        %1038 = vrot.lane.b32.xlu0 %v798, 112
        %v1039 = vpop.permute.xlu0 %1038
        %1040 = vrot.lane.b32.xlu0 %v798, 80
        %v1041 = vpop.permute.xlu0 %1040
        %v1043 = vsel %vm809, %v1039, 0
        %v1046 = vsel %vm809, %v1041, 0
        %1048 = vmatprep.subr.bf16.mxu0 0
        %1049 = vmatpush1.bf16.xpose.msra.mxu0 %v1046
        %1050 = vmatprep.subr.bf16.mxu0 0
        %1051 = vmatpush1.bf16.xpose.msra.mxu0 0
        %1052 = vmatprep.subr.bf16.mxu0 0
        %1053 = vmatpush1.bf16.xpose.msra.mxu0 0
        %1054 = vmatprep.subr.bf16.mxu0 0
        %1055 = vmatpush1.bf16.xpose.msra.mxu0 0
        %1056 = vmatprep.subr.bf16.mxu0 0
        %1057 = vmatpush1.bf16.xpose.msra.mxu0 0
        %1058 = vmatprep.subr.bf16.mxu0 0
        %1059 = vmatpush1.bf16.xpose.msra.mxu0 0
        %1060 = vmatprep.subr.bf16.mxu0 0
        %1061 = vmatpush1.bf16.xpose.msra.mxu0 0
        %1062 = vmatprep.subr.bf16.mxu0 0
        %1063 = vmatpush1.bf16.xpose.msra.mxu0 0
        %1064 = vmatprep.subr.bf16.mxu0 0
        %1065 = vmatpush1.bf16.xpose.msra.mxu0 0
        %1066 = vmatprep.subr.bf16.mxu0 0
        %1067 = vmatpush1.bf16.xpose.msra.mxu0 0
        %1068 = vmatprep.subr.bf16.mxu0 0
        %1069 = vmatpush1.bf16.xpose.msra.mxu0 0
        %1070 = vmatprep.subr.bf16.mxu0 0
        %1071 = vmatpush1.bf16.xpose.msra.mxu0 0
        %1072 = vmatprep.subr.bf16.mxu0 0
        %1073 = vmatpush1.bf16.xpose.msra.mxu0 0
        %1074 = vmatprep.subr.bf16.mxu0 0
        %1075 = vmatpush1.bf16.xpose.msra.mxu0 0
        %1076 = vmatprep.subr.bf16.mxu0 0
        %1077 = vmatpush1.bf16.xpose.msra.mxu0 0
        %1078 = vmatprep.subr.bf16.mxu0 0
        %1079 = vmatpush1.bf16.xpose.msra.mxu0 0
        %1080 = vmatprep.mubr.bf16.mxu0 0
        %1081 = vmatmul.mubr.bf16.gmra.mrb[0].mxu0 %v1043
        %v1082 = vpop.f32.mrb[0].mxu0
        %v1083 = vadd.f32 %v804, %v1082
        %v1084 = vpop.f32.mrb[0].mxu0
        %v1085 = vpop.f32.mrb[0].mxu0
        %v1086 = vpop.f32.mrb[0].mxu0
        %1087 = vdwg.mxu0
        %v1088 = vsel %vm809, %v1083, -inf
        %1089 = vmax.xlane.f32.xlu0 %v1088
        %v1090 = vpop.xlane.xlu0 %1089
        %v1091 = vsub.f32 %v1083, %v1090
        %v1092 = vmul.f32 %v1091, 1.442695
        %v1093 = vpow.pop %v1092
        %v1094 = vsel %vm809, %v1093, 0.0
        %1095 = vadd.xlane.f32.xlu0 %v1094
        %v1096 = vpop.xlane.xlu0 %1095
        %v1097 = vrcp.pop %v1096
        %v1098 = vmul.f32 1.0, %v1097
        %v1099 = vmul.f32 %v1093, %v1098
        %v1100 = vadd.f32 %v982, %v1099
        %v1101 = vpack.c.bf16 %v1099, %v1099
        %1102 = vrot.lane.b32.xlu0 %v798, 48
        %v1103 = vpop.permute.xlu0 %1102
        %v1105 = vsel %vm809, %v1101, 0
        %v1108 = vsel %vm875, %v1103, 0
        %1110 = vmatprep.subr.bf16.mxu0 0
        %1111 = vmatpush1.bf16.msra.mxu0 %v1108
        %1112 = vmatprep.subr.bf16.mxu0 0
        %1113 = vmatpush1.bf16.msra.mxu0 0
        %1114 = vmatprep.subr.bf16.mxu0 0
        %1115 = vmatpush1.bf16.msra.mxu0 0
        %1116 = vmatprep.subr.bf16.mxu0 0
        %1117 = vmatpush1.bf16.msra.mxu0 0
        %1118 = vmatprep.subr.bf16.mxu0 0
        %1119 = vmatpush1.bf16.msra.mxu0 0
        %1120 = vmatprep.subr.bf16.mxu0 0
        %1121 = vmatpush1.bf16.msra.mxu0 0
        %1122 = vmatprep.subr.bf16.mxu0 0
        %1123 = vmatpush1.bf16.msra.mxu0 0
        %1124 = vmatprep.subr.bf16.mxu0 0
        %1125 = vmatpush1.bf16.msra.mxu0 0
        %1126 = vmatprep.subr.bf16.mxu0 0
        %1127 = vmatpush1.bf16.msra.mxu0 0
        %1128 = vmatprep.subr.bf16.mxu0 0
        %1129 = vmatpush1.bf16.msra.mxu0 0
        %1130 = vmatprep.subr.bf16.mxu0 0
        %1131 = vmatpush1.bf16.msra.mxu0 0
        %1132 = vmatprep.subr.bf16.mxu0 0
        %1133 = vmatpush1.bf16.msra.mxu0 0
        %1134 = vmatprep.subr.bf16.mxu0 0
        %1135 = vmatpush1.bf16.msra.mxu0 0
        %1136 = vmatprep.subr.bf16.mxu0 0
        %1137 = vmatpush1.bf16.msra.mxu0 0
        %1138 = vmatprep.subr.bf16.mxu0 0
        %1139 = vmatpush1.bf16.msra.mxu0 0
        %1140 = vmatprep.subr.bf16.mxu0 0
        %1141 = vmatpush1.bf16.msra.mxu0 0
        %1142 = vmatprep.mubr.bf16.mxu0 0
        %1143 = vmatmul.mubr.bf16.gmra.mrb[0].mxu0 %v1105
        %v1144 = vpop.f32.mrb[0].mxu0
        %v1145 = vadd.f32 0.0, %v1144
        %v1146 = vpop.f32.mrb[0].mxu0
        %v1147 = vpop.f32.mrb[0].mxu0
        %v1148 = vpop.f32.mrb[0].mxu0
        %1149 = vdwg.mxu0
        %1151 = vrot.lane.b32.xlu0 %v1145, 16
        %v1152 = vpop.permute.xlu0 %1151
        %vm1154 = vcmask 195712
        %1155 = vst.msk [vmem:[#allocation2] sm:$0xff] %vm1154, %v1152
        %1156 = vrot.lane.b32.xlu0 %v798, 104
        %v1157 = vpop.permute.xlu0 %1156
        %1158 = vrot.lane.b32.xlu0 %v798, 72
        %v1159 = vpop.permute.xlu0 %1158
        %v1161 = vsel %vm809, %v1157, 0
        %v1164 = vsel %vm809, %v1159, 0
        %1166 = vmatprep.subr.bf16.mxu0 0
        %1167 = vmatpush1.bf16.xpose.msra.mxu0 %v1164
        %1168 = vmatprep.subr.bf16.mxu0 0
        %1169 = vmatpush1.bf16.xpose.msra.mxu0 0
        %1170 = vmatprep.subr.bf16.mxu0 0
        %1171 = vmatpush1.bf16.xpose.msra.mxu0 0
        %1172 = vmatprep.subr.bf16.mxu0 0
        %1173 = vmatpush1.bf16.xpose.msra.mxu0 0
        %1174 = vmatprep.subr.bf16.mxu0 0
        %1175 = vmatpush1.bf16.xpose.msra.mxu0 0
        %1176 = vmatprep.subr.bf16.mxu0 0
        %1177 = vmatpush1.bf16.xpose.msra.mxu0 0
        %1178 = vmatprep.subr.bf16.mxu0 0
        %1179 = vmatpush1.bf16.xpose.msra.mxu0 0
        %1180 = vmatprep.subr.bf16.mxu0 0
        %1181 = vmatpush1.bf16.xpose.msra.mxu0 0
        %1182 = vmatprep.subr.bf16.mxu0 0
        %1183 = vmatpush1.bf16.xpose.msra.mxu0 0
        %1184 = vmatprep.subr.bf16.mxu0 0
        %1185 = vmatpush1.bf16.xpose.msra.mxu0 0
        %1186 = vmatprep.subr.bf16.mxu0 0
        %1187 = vmatpush1.bf16.xpose.msra.mxu0 0
        %1188 = vmatprep.subr.bf16.mxu0 0
        %1189 = vmatpush1.bf16.xpose.msra.mxu0 0
        %1190 = vmatprep.subr.bf16.mxu0 0
        %1191 = vmatpush1.bf16.xpose.msra.mxu0 0
        %1192 = vmatprep.subr.bf16.mxu0 0
        %1193 = vmatpush1.bf16.xpose.msra.mxu0 0
        %1194 = vmatprep.subr.bf16.mxu0 0
        %1195 = vmatpush1.bf16.xpose.msra.mxu0 0
        %1196 = vmatprep.subr.bf16.mxu0 0
        %1197 = vmatpush1.bf16.xpose.msra.mxu0 0
        %1198 = vmatprep.mubr.bf16.mxu0 0
        %1199 = vmatmul.mubr.bf16.gmra.mrb[0].mxu0 %v1161
        %v1200 = vpop.f32.mrb[0].mxu0
        %v1201 = vadd.f32 %v804, %v1200
        %v1202 = vpop.f32.mrb[0].mxu0
        %v1203 = vpop.f32.mrb[0].mxu0
        %v1204 = vpop.f32.mrb[0].mxu0
        %1205 = vdwg.mxu0
        %v1206 = vsel %vm809, %v1201, -inf
        %1207 = vmax.xlane.f32.xlu0 %v1206
        %v1208 = vpop.xlane.xlu0 %1207
        %v1209 = vsub.f32 %v1201, %v1208
        %v1210 = vmul.f32 %v1209, 1.442695
        %v1211 = vpow.pop %v1210
        %v1212 = vsel %vm809, %v1211, 0.0
        %1213 = vadd.xlane.f32.xlu0 %v1212
        %v1214 = vpop.xlane.xlu0 %1213
        %v1215 = vrcp.pop %v1214
        %v1216 = vmul.f32 1.0, %v1215
        %v1217 = vmul.f32 %v1211, %v1216
        %v1218 = vadd.f32 %v1100, %v1217
        %v1219 = vpack.c.bf16 %v1217, %v1217
        %1220 = vrot.lane.b32.xlu0 %v798, 40
        %v1221 = vpop.permute.xlu0 %1220
        %v1223 = vsel %vm809, %v1219, 0
        %v1226 = vsel %vm875, %v1221, 0
        %1228 = vmatprep.subr.bf16.mxu0 0
        %1229 = vmatpush1.bf16.msra.mxu0 %v1226
        %1230 = vmatprep.subr.bf16.mxu0 0
        %1231 = vmatpush1.bf16.msra.mxu0 0
        %1232 = vmatprep.subr.bf16.mxu0 0
        %1233 = vmatpush1.bf16.msra.mxu0 0
        %1234 = vmatprep.subr.bf16.mxu0 0
        %1235 = vmatpush1.bf16.msra.mxu0 0
        %1236 = vmatprep.subr.bf16.mxu0 0
        %1237 = vmatpush1.bf16.msra.mxu0 0
        %1238 = vmatprep.subr.bf16.mxu0 0
        %1239 = vmatpush1.bf16.msra.mxu0 0
        %1240 = vmatprep.subr.bf16.mxu0 0
        %1241 = vmatpush1.bf16.msra.mxu0 0
        %1242 = vmatprep.subr.bf16.mxu0 0
        %1243 = vmatpush1.bf16.msra.mxu0 0
        %1244 = vmatprep.subr.bf16.mxu0 0
        %1245 = vmatpush1.bf16.msra.mxu0 0
        %1246 = vmatprep.subr.bf16.mxu0 0
        %1247 = vmatpush1.bf16.msra.mxu0 0
        %1248 = vmatprep.subr.bf16.mxu0 0
        %1249 = vmatpush1.bf16.msra.mxu0 0
        %1250 = vmatprep.subr.bf16.mxu0 0
        %1251 = vmatpush1.bf16.msra.mxu0 0
        %1252 = vmatprep.subr.bf16.mxu0 0
        %1253 = vmatpush1.bf16.msra.mxu0 0
        %1254 = vmatprep.subr.bf16.mxu0 0
        %1255 = vmatpush1.bf16.msra.mxu0 0
        %1256 = vmatprep.subr.bf16.mxu0 0
        %1257 = vmatpush1.bf16.msra.mxu0 0
        %1258 = vmatprep.subr.bf16.mxu0 0
        %1259 = vmatpush1.bf16.msra.mxu0 0
        %1260 = vmatprep.mubr.bf16.mxu0 0
        %1261 = vmatmul.mubr.bf16.gmra.mrb[0].mxu0 %v1223
        %v1262 = vpop.f32.mrb[0].mxu0
        %v1263 = vadd.f32 0.0, %v1262
        %v1264 = vpop.f32.mrb[0].mxu0
        %v1265 = vpop.f32.mrb[0].mxu0
        %v1266 = vpop.f32.mrb[0].mxu0
        %1267 = vdwg.mxu0
        %1269 = vrot.lane.b32.xlu0 %v1263, 24
        %v1270 = vpop.permute.xlu0 %1269
        %vm1272 = vcmask 261312
        %1273 = vst.msk [vmem:[#allocation2] sm:$0xff] %vm1272, %v1270
        %v1274 = vld [vmem:[#allocation2] sm:$0xff]
        %v1275 = vpack.c.bf16 %v1274, %v1274
        %v1276 = vld [vmem:[%s685] sm:$0xf]
        %v1277 = vld [vmem:[%s685 + $0x4] sm:$0xf]
        %v1278 = vld [vmem:[%s685 + $0x8] sm:$0xf]
        %v1279 = vld [vmem:[%s685 + $0xc] sm:$0xf]
        %v1280 = vld [vmem:[%s688] sm:$0x1]
        %v1282 = vlaneseq
        %v1283 = vshrl.u32 %v1282, 7
        %v1284 = vsub.s32 0, %v1283
        %v1285 = vrot.slane %v1280, %v1284
        %v1291 = vunpack.c.l.b16 %v1276
        %v1292 = vunpack.c.l.b16 %v1277
        %v1293 = vunpack.c.l.b16 %v1278
        %v1294 = vunpack.c.l.b16 %v1279
        %v1295 = vpack.c.b16 %v1292, %v1291
        %v1296 = vpack.c.b16 %v1294, %v1293
        %v1300 = vsel %vm754, %v1275, 0
        %1302 = vmatprep.subr.bf16.mxu0 0
        %1303 = vmatpush1.bf16.msra.mxu0 %v1295
        %1304 = vmatprep.subr.bf16.mxu0 0
        %1305 = vmatpush1.bf16.msra.mxu0 %v1296
        %1306 = vmatprep.subr.bf16.mxu0 0
        %1307 = vmatpush1.bf16.msra.mxu0 0
        %1308 = vmatprep.subr.bf16.mxu0 0
        %1309 = vmatpush1.bf16.msra.mxu0 0
        %1310 = vmatprep.subr.bf16.mxu0 0
        %1311 = vmatpush1.bf16.msra.mxu0 0
        %1312 = vmatprep.subr.bf16.mxu0 0
        %1313 = vmatpush1.bf16.msra.mxu0 0
        %1314 = vmatprep.subr.bf16.mxu0 0
        %1315 = vmatpush1.bf16.msra.mxu0 0
        %1316 = vmatprep.subr.bf16.mxu0 0
        %1317 = vmatpush1.bf16.msra.mxu0 0
        %1318 = vmatprep.subr.bf16.mxu0 0
        %1319 = vmatpush1.bf16.msra.mxu0 0
        %1320 = vmatprep.subr.bf16.mxu0 0
        %1321 = vmatpush1.bf16.msra.mxu0 0
        %1322 = vmatprep.subr.bf16.mxu0 0
        %1323 = vmatpush1.bf16.msra.mxu0 0
        %1324 = vmatprep.subr.bf16.mxu0 0
        %1325 = vmatpush1.bf16.msra.mxu0 0
        %1326 = vmatprep.subr.bf16.mxu0 0
        %1327 = vmatpush1.bf16.msra.mxu0 0
        %1328 = vmatprep.subr.bf16.mxu0 0
        %1329 = vmatpush1.bf16.msra.mxu0 0
        %1330 = vmatprep.subr.bf16.mxu0 0
        %1331 = vmatpush1.bf16.msra.mxu0 0
        %1332 = vmatprep.subr.bf16.mxu0 0
        %1333 = vmatpush1.bf16.msra.mxu0 0
        %1334 = vmatprep.mubr.bf16.mxu0 0
        %1335 = vmatmul.mubr.bf16.gmra.mrb[0].mxu0 %v1300
        %v1336 = vpop.f32.mrb[0].mxu0
        %v1337 = vadd.f32 %v1285, %v1336
        %v1338 = vpop.f32.mrb[0].mxu0
        %v1339 = vpop.f32.mrb[0].mxu0
        %v1340 = vpop.f32.mrb[0].mxu0
        %1341 = vdwg.mxu0
        %v1342 = vadd.f32 %v729, %v1337
        %v1343 = vld [vmem:[%s691] sm:$0x1]
        %v1344 = vld [vmem:[%s694] sm:$0x1]
        %v1345 = vsel %vm754, %v1342, 0.0
        %1346 = vadd.xlane.f32.xlu0 %v1345
        %v1347 = vpop.xlane.xlu0 %1346
        %v1348 = vrcp.pop 32.0
        %v1349 = vmul.f32 %v1347, %v1348
        %v1350 = vsub.f32 %v1342, %v1349
        %v1351 = vmul.f32 %v1350, %v1350
        %v1352 = vsel %vm754, %v1351, 0.0
        %1353 = vadd.xlane.f32.xlu0 %v1352
        %v1354 = vpop.xlane.xlu0 %1353
        %v1355 = vmul.f32 %v1354, %v1348
        %v1356 = vadd.f32 %v1355, 1e-05
        %v1357 = vrsqrt.pop %v1356
        %v1358 = vmul.f32 %v1350, %v1357
        %v1360 = vlaneseq
        %v1361 = vshrl.u32 %v1360, 7
        %v1362 = vsub.s32 0, %v1361
        %v1363 = vrot.slane %v1343, %v1362
        %v1365 = vmul.f32 %v1358, %v1363
        %v1367 = vlaneseq
        %v1368 = vshrl.u32 %v1367, 7
        %v1369 = vsub.s32 0, %v1368
        %v1370 = vrot.slane %v1344, %v1369
        %v1372 = vadd.f32 %v1365, %v1370
        %v1373 = vpack.c.bf16 %v1372, %v1372
        %v1374 = vld [vmem:[%s699] sm:$0xf]
        %v1375 = vld [vmem:[%s699 + $0x4] sm:$0xf]
        %v1376 = vld [vmem:[%s699 + $0x8] sm:$0xf]
        %v1377 = vld [vmem:[%s699 + $0xc] sm:$0xf]
        %v1378 = vld [vmem:[%s702] sm:$0x1]
        %v1380 = vlaneseq
        %v1381 = vshrl.u32 %v1380, 7
        %v1382 = vsub.s32 0, %v1381
        %v1383 = vrot.slane %v1378, %v1382
        %v1389 = vunpack.c.l.b16 %v1374
        %v1390 = vunpack.c.l.b16 %v1375
        %v1391 = vunpack.c.l.b16 %v1376
        %v1392 = vunpack.c.l.b16 %v1377
        %v1393 = vpack.c.b16 %v1390, %v1389
        %v1394 = vpack.c.b16 %v1392, %v1391
        %v1398 = vsel %vm754, %v1373, 0
        %1400 = vmatprep.subr.bf16.mxu0 0
        %1401 = vmatpush1.bf16.msra.mxu0 %v1393
        %1402 = vmatprep.subr.bf16.mxu0 0
        %1403 = vmatpush1.bf16.msra.mxu0 %v1394
        %1404 = vmatprep.subr.bf16.mxu0 0
        %1405 = vmatpush1.bf16.msra.mxu0 0
        %1406 = vmatprep.subr.bf16.mxu0 0
        %1407 = vmatpush1.bf16.msra.mxu0 0
        %1408 = vmatprep.subr.bf16.mxu0 0
        %1409 = vmatpush1.bf16.msra.mxu0 0
        %1410 = vmatprep.subr.bf16.mxu0 0
        %1411 = vmatpush1.bf16.msra.mxu0 0
        %1412 = vmatprep.subr.bf16.mxu0 0
        %1413 = vmatpush1.bf16.msra.mxu0 0
        %1414 = vmatprep.subr.bf16.mxu0 0
        %1415 = vmatpush1.bf16.msra.mxu0 0
        %1416 = vmatprep.subr.bf16.mxu0 0
        %1417 = vmatpush1.bf16.msra.mxu0 0
        %1418 = vmatprep.subr.bf16.mxu0 0
        %1419 = vmatpush1.bf16.msra.mxu0 0
        %1420 = vmatprep.subr.bf16.mxu0 0
        %1421 = vmatpush1.bf16.msra.mxu0 0
        %1422 = vmatprep.subr.bf16.mxu0 0
        %1423 = vmatpush1.bf16.msra.mxu0 0
        %1424 = vmatprep.subr.bf16.mxu0 0
        %1425 = vmatpush1.bf16.msra.mxu0 0
        %1426 = vmatprep.subr.bf16.mxu0 0
        %1427 = vmatpush1.bf16.msra.mxu0 0
        %1428 = vmatprep.subr.bf16.mxu0 0
        %1429 = vmatpush1.bf16.msra.mxu0 0
        %1430 = vmatprep.subr.bf16.mxu0 0
        %1431 = vmatpush1.bf16.msra.mxu0 0
        %1432 = vmatprep.mubr.bf16.mxu0 0
        %1433 = vmatmul.mubr.bf16.gmra.mrb[0].mxu0 %v1398
        %v1434 = vpop.f32.mrb[0].mxu0
        %v1435 = vadd.f32 %v1383, %v1434
        %v1436 = vpop.f32.mrb[0].mxu0
        %v1437 = vpop.f32.mrb[0].mxu0
        %v1438 = vpop.f32.mrb[0].mxu0
        %1439 = vdwg.mxu0
        %v1440 = vmax.f32 %v1435, 0.0
        %v1441 = vpack.c.bf16 %v1440, %v1440
        %v1442 = vld [vmem:[%s707] sm:$0xf]
        %v1443 = vld [vmem:[%s707 + $0x4] sm:$0xf]
        %v1444 = vld [vmem:[%s707 + $0x8] sm:$0xf]
        %v1445 = vld [vmem:[%s707 + $0xc] sm:$0xf]
        %v1446 = vld [vmem:[%s707 + $0x10] sm:$0xf]
        %v1447 = vld [vmem:[%s707 + $0x14] sm:$0xf]
        %v1448 = vld [vmem:[%s707 + $0x18] sm:$0xf]
        %v1449 = vld [vmem:[%s707 + $0x1c] sm:$0xf]
        %v1450 = vld [vmem:[%s710] sm:$0x1]
        %v1452 = vlaneseq
        %v1453 = vshrl.u32 %v1452, 7
        %v1454 = vsub.s32 0, %v1453
        %v1455 = vrot.slane %v1450, %v1454
        %v1465 = vunpack.c.l.b16 %v1442
        %v1466 = vunpack.c.l.b16 %v1443
        %v1467 = vunpack.c.l.b16 %v1444
        %v1468 = vunpack.c.l.b16 %v1445
        %v1469 = vunpack.c.l.b16 %v1446
        %v1470 = vunpack.c.l.b16 %v1447
        %v1471 = vunpack.c.l.b16 %v1448
        %v1472 = vunpack.c.l.b16 %v1449
        %v1473 = vpack.c.b16 %v1466, %v1465
        %v1474 = vpack.c.b16 %v1468, %v1467
        %v1475 = vpack.c.b16 %v1470, %v1469
        %v1476 = vpack.c.b16 %v1472, %v1471
        %vm1481 = vcmask 523264
        %v1483 = vsel %vm1481, %v1441, 0
        %1485 = vmatprep.subr.bf16.mxu0 0
        %1486 = vmatpush1.bf16.msra.mxu0 %v1473
        %1487 = vmatprep.subr.bf16.mxu0 0
        %1488 = vmatpush1.bf16.msra.mxu0 %v1474
        %1489 = vmatprep.subr.bf16.mxu0 0
        %1490 = vmatpush1.bf16.msra.mxu0 %v1475
        %1491 = vmatprep.subr.bf16.mxu0 0
        %1492 = vmatpush1.bf16.msra.mxu0 %v1476
        %1493 = vmatprep.subr.bf16.mxu0 0
        %1494 = vmatpush1.bf16.msra.mxu0 0
        %1495 = vmatprep.subr.bf16.mxu0 0
        %1496 = vmatpush1.bf16.msra.mxu0 0
        %1497 = vmatprep.subr.bf16.mxu0 0
        %1498 = vmatpush1.bf16.msra.mxu0 0
        %1499 = vmatprep.subr.bf16.mxu0 0
        %1500 = vmatpush1.bf16.msra.mxu0 0
        %1501 = vmatprep.subr.bf16.mxu0 0
        %1502 = vmatpush1.bf16.msra.mxu0 0
        %1503 = vmatprep.subr.bf16.mxu0 0
        %1504 = vmatpush1.bf16.msra.mxu0 0
        %1505 = vmatprep.subr.bf16.mxu0 0
        %1506 = vmatpush1.bf16.msra.mxu0 0
        %1507 = vmatprep.subr.bf16.mxu0 0
        %1508 = vmatpush1.bf16.msra.mxu0 0
        %1509 = vmatprep.subr.bf16.mxu0 0
        %1510 = vmatpush1.bf16.msra.mxu0 0
        %1511 = vmatprep.subr.bf16.mxu0 0
        %1512 = vmatpush1.bf16.msra.mxu0 0
        %1513 = vmatprep.subr.bf16.mxu0 0
        %1514 = vmatpush1.bf16.msra.mxu0 0
        %1515 = vmatprep.subr.bf16.mxu0 0
        %1516 = vmatpush1.bf16.msra.mxu0 0
        %1517 = vmatprep.mubr.bf16.mxu0 0
        %1518 = vmatmul.mubr.bf16.gmra.mrb[0].mxu0 %v1483
        %v1519 = vpop.f32.mrb[0].mxu0
        %v1520 = vadd.f32 %v1455, %v1519
        %v1521 = vpop.f32.mrb[0].mxu0
        %v1522 = vpop.f32.mrb[0].mxu0
        %v1523 = vpop.f32.mrb[0].mxu0
        %1524 = vdwg.mxu0
        %v1525 = vadd.f32 %v1372, %v1520
        %v1526 = vld [vmem:[%s713] sm:$0x1]
        %v1527 = vld [vmem:[%s716] sm:$0x1]
        %v1528 = vsel %vm754, %v1525, 0.0
        %1529 = vadd.xlane.f32.xlu0 %v1528
        %v1530 = vpop.xlane.xlu0 %1529
        %v1531 = vmul.f32 %v1530, %v1348
        %v1532 = vsub.f32 %v1525, %v1531
        %v1533 = vmul.f32 %v1532, %v1532
        %v1534 = vsel %vm754, %v1533, 0.0
        %1535 = vadd.xlane.f32.xlu0 %v1534
        %v1536 = vpop.xlane.xlu0 %1535
        %v1537 = vmul.f32 %v1536, %v1348
        %v1538 = vadd.f32 %v1537, 1e-05
        %v1539 = vrsqrt.pop %v1538
        %v1540 = vmul.f32 %v1532, %v1539
        %v1542 = vlaneseq
        %v1543 = vshrl.u32 %v1542, 7
        %v1544 = vsub.s32 0, %v1543
        %v1545 = vrot.slane %v1526, %v1544
        %v1547 = vmul.f32 %v1540, %v1545
        %v1549 = vlaneseq
        %v1550 = vshrl.u32 %v1549, 7
        %v1551 = vsub.s32 0, %v1550
        %v1552 = vrot.slane %v1527, %v1551
        %v1554 = vadd.f32 %v1547, %v1552
        %1555 = vst.msk [vmem:[%s720] sm:$0xff] %vm754, %v1554
        %v1556 = vmul.f32 %v1218, 0.25
        %1557 = vst.msk [vmem:[%s665] sm:$0xff] %vm809, %v1556
        %p1558 = scmp.lt.s32.totalorder %s34, 1
        %s1559 = scalar_select %p1558, %s34, 1
        %s1560 = smul.addr %s1559, 8
        %s1561 = scalar_lea.vmem %s14, %s1560
        %s1562 = sand.u32 %s442, 1
        %s1563 = scalar_lea.sflag [#allocation4], %s1562
        %s1564 = sand.u32 %s442, 1
        %s1565 = smul.addr %s1564, 8
        %s1566 = scalar_lea.vmem [#allocation3], %s1565
        // Predicated region
        $region81: #{transformer_encoder.1} parent=75 // pred_check
          %p1567 = pneg %p424
        $region82: #{transformer_encoder.1} parent=75 // pred_check_branch
          %1569 = sbr.rel (%p1567) target = $region84
        $region83: #{transformer_encoder.1} parent=75 // pred_region
          _
        $region84: #{transformer_encoder.1} parent=75 // pred_fallthru
          _
        // Predicated region
        $region85: #{transformer_encoder.1} parent=75 // pred_check
          %p1570 = pneg %p452
        $region86: #{transformer_encoder.1} parent=75 // pred_check_branch
          %1572 = sbr.rel (%p1570) target = $region88
        $region87: #{transformer_encoder.1} parent=75 // pred_region
          %s1574 = ssub.s32 128, 128
          %1575 = vsyncadd %s1563, %s1574
          %s1576 = smul.addr %s35, 2
          %s1577 = sadd.s32 %s34, %s1576
          %s1578 = smul.addr %s1577, 128
          %s1579 = scalar_lea.hbm %s15, %s1578
          %s1581 = sshll.u32 %s1566, 4
          %s1582 = int_to_ptr.vmem [resolvable:$true] %s1581
          %1584 = dma.vmem_to_hbm [thread:$0]  %s1582, 128, %s1579, %s1563
        $region88: #{transformer_encoder.1} parent=75 // pred_fallthru
          _
      $region76: #{transformer_encoder.1} parent=5 // pred_fallthru
        _
      %p1585 = scmp.le.s32.totalorder 2, %s25
      // Predicated region
      $region89: #{transformer_encoder.1} parent=5 // pred_check
        %p1586 = pneg %p1585
      $region90: #{transformer_encoder.1} parent=5 // pred_check_branch
        %1588 = sbr.rel (%p1586) target = $region92
      $region91: #{transformer_encoder.1} parent=5 // pred_region
        %s1589 = ssub.s32 %s25, 2
        // Predicated region
        $region93: #{transformer_encoder.1} parent=91 // pred_check
          %p1590 = pneg %p430
        $region94: #{transformer_encoder.1} parent=91 // pred_check_branch
          %1592 = sbr.rel (%p1590) target = $region96
        $region95: #{transformer_encoder.1} parent=91 // pred_region
          %p1593 = scmp.lt.s32.totalorder %s36, 1
          %s1594 = scalar_select %p1593, %s36, 1
          %s1595 = smul.addr %s1594, 8
          %s1596 = scalar_lea.vmem %s14, %s1595
        $region96: #{transformer_encoder.1} parent=91 // pred_fallthru
          _
        // Predicated region
        $region97: #{transformer_encoder.1} parent=91 // pred_check
          %p1597 = pneg %p458
        $region98: #{transformer_encoder.1} parent=91 // pred_check_branch
          %1599 = sbr.rel (%p1597) target = $region100
        $region99: #{transformer_encoder.1} parent=91 // pred_region
          %s1600 = sand.u32 %s443, 1
          %s1601 = scalar_lea.sflag [#allocation4], %s1600
          %s1602 = sand.u32 %s443, 1
          %s1603 = smul.addr %s1602, 8
          %s1604 = scalar_lea.vmem [#allocation3], %s1603
          %1605 = dma.done %s1601, 128
        $region100: #{transformer_encoder.1} parent=91 // pred_fallthru
          _
      $region92: #{transformer_encoder.1} parent=5 // pred_fallthru
        _
    $region6: #{transformer_encoder.1} parent=1 // loop_footer
      %s29 = sadd.s32 1, %s25
    $region7: #{transformer_encoder.1} parent=1 // loop_footer_branch
      %24 = sbr.rel target = $region3
    $region8: #{transformer_encoder.1} parent=1 // loop_exit
      _
    %1606 = vsyncpa [#allocation4], 1
    %s1607 = scalar_lea.sflag [#allocation4], 1
    %1608 = vsyncpa %s1607, 1

</llo_original>
